<compile_context>
chip_gen: v7x
topology: tpu7x:2x2x1
jax: 0.10.0
libtpu: 0.0.40
codegen_flags: <defaults>
</compile_context>

<pallas_src>
import math

import numpy as np

import jax
import jax.numpy as jnp
from jax.experimental import pallas as pl
from jax.experimental.pallas import tpu as pltpu


def _round_up(x, m):
    return (x + m - 1) // m * m


# ----------------------------------------------------------------------------
# Kernel: dense target fill.
# For grid point (b, ot) produce the (A, C_pad, TILE_O) slab of targets:
# per anchor a, H[m, o] = (gt_key[m] == o*A + a) selects (at most) the one
# de-duplicated gt writing cell (o, a); V @ H scatters its packed value row.
# Channel layout: [obj, tx, ty, sx, sy, wt, wt, onehot(K), hit, pad...].
# Class channels get a `hit - 1` correction so background is -1.
# ----------------------------------------------------------------------------
def _make_fill_kernel(A, K, C_pad, TILE_O):
    hit_ch = 7 + K

    def kernel(gt_key_ref, v_hi_ref, v_lo_ref, out_ref):
        # gt_key_ref: (1, M_pad, 1) int32  -- packed cell key per gt (-1 = no write)
        # v_hi/v_lo : (1, C_pad, M_pad) bf16 -- hi/lo split of per-gt f32 value rows
        # out_ref   : (1, A, C_pad, TILE_O) f32
        o_start = pl.program_id(1) * TILE_O
        gk = gt_key_ref[0]                                            # (M_pad, 1)
        vhi = v_hi_ref[0]                                             # (C_pad, M_pad)
        vlo = v_lo_ref[0]
        lane_o = jax.lax.broadcasted_iota(jnp.int32, (1, TILE_O), 1) + o_start
        c_iota = jax.lax.broadcasted_iota(jnp.int32, (C_pad, 1), 0)
        cls_rows = (c_iota >= 7) & (c_iota < 7 + K)                   # class channels

        for a in range(A):                                            # static, small
            cell_key = lane_o * A + a                                 # (1, TILE_O)
            h = jnp.where(gk == cell_key, 1.0, 0.0).astype(jnp.bfloat16)  # (M_pad, TILE_O)
            t = (jnp.dot(vhi, h, preferred_element_type=jnp.float32)
                 + jnp.dot(vlo, h, preferred_element_type=jnp.float32))   # (C_pad, TILE_O)
            hit = t[hit_ch:hit_ch + 1, :]                             # (1, TILE_O)
            # class background = -1; everything else defaults to 0.
            out_ref[0, a, :, :] = t + jnp.where(cls_rows, hit - 1.0, 0.0)

    return kernel


# ----------------------------------------------------------------------------
# Wrapper: per-GT scalar prep (plain JAX glue) + one pallas_call + layout glue.
# ----------------------------------------------------------------------------
def yolo3_prefetch_targets(h, w, xs, anchors, offsets, gt_boxes, gt_ids,
                           gt_mixratio=None, num_class=4):
    all_anchors = jnp.concatenate(
        [jnp.asarray(a, jnp.float32).reshape(-1, 2) for a in anchors], axis=0)  # (A, 2)
    anc_counts = [int(np.prod(np.asarray(a).shape)) // 2 for a in anchors]
    off_counts = [int(np.prod(np.asarray(o).shape)) // 2 for o in offsets]
    num_anchors_cum = np.cumsum(anc_counts)
    num_offsets_cum = np.cumsum(off_counts)
    A = int(num_anchors_cum[-1])
    O = int(num_offsets_cum[-1])
    L = len(anchors)
    assert len(xs) == len(anchors) == len(offsets)
    K = int(num_class)

    gb = jnp.asarray(gt_boxes, jnp.float32)
    B, M, _ = gb.shape

    # corner -> center (BBoxCornerToCenter, axis=-1)
    gtw = gb[..., 2] - gb[..., 0]
    gth = gb[..., 3] - gb[..., 1]
    gtx = gb[..., 0] + 0.5 * gtw
    gty = gb[..., 1] + 0.5 * gth

    # ---- anchor-vs-gt IOU (zero-centered corners) + argmax over anchors ----
    # B*M*A is a few hundred elements: plain JAX, no dedicated kernel launch.
    aw = all_anchors[:, 0]
    ah = all_anchors[:, 1]
    xi = jnp.maximum(-0.5 * gtw[..., None], -0.5 * aw)
    yi = jnp.maximum(-0.5 * gth[..., None], -0.5 * ah)
    xa = jnp.minimum(0.5 * gtw[..., None], 0.5 * aw)
    ya = jnp.minimum(0.5 * gth[..., None], 0.5 * ah)
    inter = jnp.maximum(xa - xi, 0.0) * jnp.maximum(ya - yi, 0.0)
    iou = inter / (aw * ah + (gtw * gth)[..., None] - inter + 1e-12)
    matches = jnp.argmax(iou, axis=-1).astype(jnp.int32)               # (B, M)

    # ---- per-GT scalar bookkeeping (B*M scalars; plain JAX glue) ----
    valid = jnp.all(gb >= 0, axis=-1)
    valid_cum = jnp.cumprod(valid.astype(jnp.int32), axis=1)           # python `break`

    na_cum = jnp.asarray(num_anchors_cum, jnp.int32)
    nlayer = jnp.sum(matches[:, :, None] >= na_cum[None, None, :], axis=-1)

    layer_h = jnp.asarray([int(x.shape[2]) for x in xs], jnp.int32)
    layer_w = jnp.asarray([int(x.shape[3]) for x in xs], jnp.int32)
    width_i = jnp.take(layer_w, nlayer)
    height_i = jnp.take(layer_h, nlayer)
    off_start = jnp.asarray(np.concatenate([[0], num_offsets_cum[:-1]]), jnp.int32)

    fx = gtx / float(w) * width_i.astype(jnp.float32)
    fy = gty / float(h) * height_i.astype(jnp.float32)
    loc_x = fx.astype(jnp.int32)                 # truncation toward zero, like int()
    loc_y = fy.astype(jnp.int32)
    # `index` may be garbage for invalid gts; it is only ever used via gt_key
    # (masked to -1 below), never as a memory address.
    index = jnp.take(off_start, nlayer) + loc_y * width_i + loc_x
    tx = fx - loc_x.astype(jnp.float32)
    ty = fy - loc_y.astype(jnp.float32)

    m_aw = jnp.take(aw, matches)
    m_ah = jnp.take(ah, matches)
    sx = jnp.log(jnp.maximum(gtw, 1.0) / m_aw)
    sy = jnp.log(jnp.maximum(gth, 1.0) / m_ah)
    wt = 2.0 - gtw * gth / float(w) / float(h)
    if gt_mixratio is not None:
        obj = jnp.asarray(gt_mixratio, jnp.float32)[..., 0]
    else:
        obj = jnp.ones((B, M), jnp.float32)
    cls = jnp.asarray(gt_ids)[..., 0].astype(jnp.int32)

    # ---- winning-gt dedup: PyTorch sequential overwrite => last valid gt wins ----
    keys = (index * A + matches).astype(jnp.int32)       # unique per (cell, anchor)
    key_eff = jnp.where(valid_cum > 0, keys, -1)
    m_idx = jnp.arange(M, dtype=jnp.int32)
    later_same = (key_eff[:, :, None] == key_eff[:, None, :]) & \
                 (m_idx[None, None, :] > m_idx[None, :, None])
    dup_later = jnp.any(later_same, axis=2)
    kept = (valid_cum > 0) & jnp.logical_not(dup_later)
    gt_key = jnp.where(kept, keys, -1).astype(jnp.int32)               # (B, M)

    # ---- packed per-gt value rows: [obj, tx, ty, sx, sy, wt, wt, onehot(K), hit] ----
    C_val = 8 + K
    C_pad = _round_up(C_val, 8)
    M_pad = _round_up(max(M, 1), 128)
    TILE_O = min(512, _round_up(O, 128))
    O_pad = _round_up(O, TILE_O)

    onehot = (cls[..., None] == jnp.arange(K, dtype=jnp.int32)).astype(jnp.float32)
    vals = jnp.concatenate(
        [obj[..., None], tx[..., None], ty[..., None], sx[..., None], sy[..., None],
         wt[..., None], wt[..., None], onehot, jnp.ones((B, M, 1), jnp.float32)],
        axis=-1)                                                       # (B, M, C_val)
    vals = jnp.where(kept[..., None], vals, 0.0)
    vals = jnp.transpose(vals, (0, 2, 1))                              # (B, C_val, M)
    vals = jnp.pad(vals, ((0, 0), (0, C_pad - C_val), (0, M_pad - M)))
    v_hi = vals.astype(jnp.bfloat16)                                   # exact bf16 part
    v_lo = (vals - v_hi.astype(jnp.float32)).astype(jnp.bfloat16)      # residual
    gt_key_p = jnp.pad(gt_key, ((0, 0), (0, M_pad - M)),
                       constant_values=-1)[..., None]                  # (B, M_pad, 1)

    kernel = _make_fill_kernel(A, K, C_pad, TILE_O)
    dense = pl.pallas_call(
        kernel,
        out_shape=jax.ShapeDtypeStruct((B, A, C_pad, O_pad), jnp.float32),
        grid=(B, O_pad // TILE_O),
        in_specs=[
            pl.BlockSpec((1, M_pad, 1), lambda b, ot: (b, 0, 0)),
            pl.BlockSpec((1, C_pad, M_pad), lambda b, ot: (b, 0, 0)),
            pl.BlockSpec((1, C_pad, M_pad), lambda b, ot: (b, 0, 0)),
        ],
        out_specs=pl.BlockSpec((1, A, C_pad, TILE_O), lambda b, ot: (b, 0, 0, ot)),
        compiler_params=pltpu.CompilerParams(
            dimension_semantics=("parallel", "parallel")),
    )(gt_key_p, v_hi, v_lo)

    # ---- unpack fused lane-dense layout + the module's `_slice` (layout glue) ----
    dense = jnp.transpose(dense[:, :, :, :O], (0, 3, 1, 2))            # (B, O, A, C_pad)
    obj_t = dense[..., 0:1]
    center_t = dense[..., 1:3]
    scale_t = dense[..., 3:5]
    weight_t = dense[..., 5:7]
    class_t = dense[..., 7:7 + K]

    anc_b = [0] + [int(v) for v in num_anchors_cum]
    off_b = [0] + [int(v) for v in num_offsets_cum]

    def _slice(x):
        parts = []
        for i in range(L):
            y = x[:, off_b[i]:off_b[i + 1], anc_b[i]:anc_b[i + 1], :]
            parts.append(y.reshape(B, -1, x.shape[-1]))
        return jnp.concatenate(parts, axis=1)

    return (_slice(obj_t), _slice(center_t), _slice(scale_t),
            _slice(weight_t), _slice(class_t))


# ----------------------------------------------------------------------------
# NumPy reference that mirrors the PyTorch module line by line.
# ----------------------------------------------------------------------------
def numpy_reference(h, w, xs, anchors, offsets, gt_boxes, gt_ids, num_class):
    anchors_np = [np.asarray(a, np.float32) for a in anchors]
    offsets_np = [np.asarray(o, np.float32) for o in offsets]
    all_anchors = np.concatenate([a.reshape(-1, 2) for a in anchors_np], 0)
    num_anchors = np.cumsum([a.size // 2 for a in anchors_np])
    num_offsets = np.cumsum([o.size // 2 for o in offsets_np])
    _offsets = [0] + num_offsets.tolist()
    gt_boxes = np.asarray(gt_boxes, np.float32)
    gt_ids = np.asarray(gt_ids, np.float32)
    B, M, _ = gt_boxes.shape
    O, A = int(num_offsets[-1]), int(num_anchors[-1])

    center_targets = np.zeros((B, O, A, 2), np.float32)
    scale_targets = np.zeros_like(center_targets)
    weights = np.zeros_like(center_targets)
    objectness = np.zeros((B, O, A, 1), np.float32)
    class_targets = -np.ones((B, O, A, num_class), np.float32)

    gtw = gt_boxes[..., 2] - gt_boxes[..., 0]
    gth = gt_boxes[..., 3] - gt_boxes[..., 1]
    gtx = gt_boxes[..., 0] + gtw * np.float32(0.5)
    gty = gt_boxes[..., 1] + gth * np.float32(0.5)

    shift_gt = np.stack([-0.5 * gtw, -0.5 * gth, 0.5 * gtw, 0.5 * gth], -1)
    anc = np.stack([-0.5 * all_anchors[:, 0], -0.5 * all_anchors[:, 1],
                    0.5 * all_anchors[:, 0], 0.5 * all_anchors[:, 1]], -1)
    matches = np.zeros((B, M), np.int64)
    for b in range(B):
        xi = np.maximum(anc[:, None, 0], shift_gt[b, None, :, 0])
        yi = np.maximum(anc[:, None, 1], shift_gt[b, None, :, 1])
        xa = np.minimum(anc[:, None, 2], shift_gt[b, None, :, 2])
        ya = np.minimum(anc[:, None, 3], shift_gt[b, None, :, 3])
        inter = np.maximum(xa - xi, 0) * np.maximum(ya - yi, 0)
        area_a = (anc[:, 2] - anc[:, 0]) * (anc[:, 3] - anc[:, 1])
        area_g = (shift_gt[b, :, 2] - shift_gt[b, :, 0]) * (shift_gt[b, :, 3] - shift_gt[b, :, 1])
        iou = inter / (area_a[:, None] + area_g[None, :] - inter + 1e-12)
        matches[b] = np.argmax(iou, axis=0)

    valid_gts = (gt_boxes >= 0).prod(axis=-1)
    for b in range(B):
        for m in range(M):
            if valid_gts[b, m] < 1:
                break
            match = int(matches[b, m])
            nlayer = int(np.nonzero(num_anchors > match)[0][0])
            height = xs[nlayer].shape[2]
            width = xs[nlayer].shape[3]
            gx, gy, gw_, gh_ = gtx[b, m], gty[b, m], gtw[b, m], gth[b, m]
            loc_x = int(gx / w * width)
            loc_y = int(gy / h * height)
            index = _offsets[nlayer] + loc_y * width + loc_x
            center_targets[b, index, match, 0] = gx / w * width - loc_x
            center_targets[b, index, match, 1] = gy / h * height - loc_y
            scale_targets[b, index, match, 0] = math.log(max(gw_, 1) / all_anchors[match, 0])
            scale_targets[b, index, match, 1] = math.log(max(gh_, 1) / all_anchors[match, 1])
            weights[b, index, match, :] = 2.0 - gw_ * gh_ / w / h
            objectness[b, index, match, 0] = 1
            class_targets[b, index, match, :] = 0
            class_targets[b, index, match, int(gt_ids[b, m, 0])] = 1

    anc_b = [0] + num_anchors.tolist()
    off_b = [0] + num_offsets.tolist()

    def _slice(x):
        parts = []
        for i in range(len(num_anchors)):
            y = x[:, off_b[i]:off_b[i + 1], anc_b[i]:anc_b[i + 1], :]
            parts.append(y.reshape(B, -1, y.shape[-1]))
        return np.concatenate(parts, axis=1)

    return tuple(_slice(x) for x in
                 (objectness, center_targets, scale_targets, weights, class_targets))


if __name__ == "__main__":
    key = jax.random.PRNGKey(0)
    num_class = 4
    B, M = 2, 4
    h = w = 32
    strides = [8, 16, 32]
    feat_hw = [(h // s, w // s) for s in strides]             # (4,4), (2,2), (1,1)

    # feature maps (NCHW, only shapes are consumed by the target generator)
    xs = [jnp.zeros((B, 8, fh, fw), jnp.float32) for fh, fw in feat_hw]

    # three anchors per level, distinct sizes (pixels)
    anchors = [jnp.array([[3., 4.], [5., 8.], [8., 6.]], jnp.float32),
               jnp.array([[10., 12.], [14., 9.], [16., 16.]], jnp.float32),
               jnp.array([[20., 24.], [26., 18.], [30., 30.]], jnp.float32)]

    # pre-generated x/y grid offsets per level
    offsets = []
    for fh, fw in feat_hw:
        yy, xx = jnp.meshgrid(jnp.arange(fh, dtype=jnp.float32),
                              jnp.arange(fw, dtype=jnp.float32), indexing="ij")
        offsets.append(jnp.stack([xx, yy], axis=-1).reshape(1, fh, fw, 2))

    # deterministic ground-truth boxes / ids
    k1, k2, k3 = jax.random.split(key, 3)
    cxcy = jax.random.uniform(k1, (B, M, 2), minval=4.0, maxval=28.0)
    wh = jax.random.uniform(k2, (B, M, 2), minval=3.0, maxval=12.0)
    xymin = jnp.clip(cxcy - wh / 2, 0.0, 31.0)
    xymax = jnp.clip(cxcy + wh / 2, 1.0, 31.5)
    gt_boxes = jnp.concatenate([xymin, xymax], axis=-1)
    gt_boxes = gt_boxes.at[1, 3, :].set(-1.0)   # one invalid gt -> early break path
    gt_ids = jax.random.randint(k3, (B, M, 1), 0, num_class).astype(jnp.float32)

    outs = yolo3_prefetch_targets(h, w, xs, anchors, offsets, gt_boxes, gt_ids,
                                  gt_mixratio=None, num_class=num_class)
    outs = jax.block_until_ready(outs)

    refs = numpy_reference(h, w, xs, anchors, offsets,
                           np.asarray(gt_boxes), np.asarray(gt_ids), num_class)
    names = ["objectness", "center_targets", "scale_targets", "weights", "class_targets"]
    for name, o, r in zip(names, outs, refs):
        assert o.shape == r.shape, (name, o.shape, r.shape)
        np.testing.assert_allclose(np.asarray(o), r, rtol=1e-4, atol=1e-4,
                                   err_msg=name)
    print("KERNEL_OK")
</pallas_src>

<mosaic_0001>
module attributes {stable_mosaic.version = 11 : i64} {
  func.func @kernel(%arg0: i32, %arg1: i32, %arg2: memref<1x128x1xi32, #tpu.memory_space<vmem>>, %arg3: memref<1x16x128xbf16, #tpu.memory_space<vmem>>, %arg4: memref<1x16x128xbf16, #tpu.memory_space<vmem>>, %arg5: memref<1x9x16x128xf32, #tpu.memory_space<vmem>>) attributes {dimension_semantics = [#tpu.dimension_semantics<parallel>, #tpu.dimension_semantics<parallel>], iteration_bounds = array<i64: 2, 1>, scalar_prefetch = 0 : i64, scratch_operands = 0 : i64, tpu.core_type = #tpu.core_type<tc>, window_params = [{transform_indices = @transform_0, window_bounds = array<i64: 1, 128, 1>}, {transform_indices = @transform_1, window_bounds = array<i64: 1, 16, 128>}, {transform_indices = @transform_2, window_bounds = array<i64: 1, 16, 128>}, {transform_indices = @transform_3, window_bounds = array<i64: 1, 9, 16, 128>}]} {
    %c128_i32 = arith.constant 128 : i32
    %0 = arith.muli %arg1, %c128_i32 : i32
    %c0 = arith.constant 0 : index
    %c0_0 = arith.constant 0 : index
    %c0_1 = arith.constant 0 : index
    %1 = vector.load %arg2[%c0, %c0_0, %c0_1] : memref<1x128x1xi32, #tpu.memory_space<vmem>>, vector<1x128x1xi32>
    %2 = vector.shape_cast %1 : vector<1x128x1xi32> to vector<128x1xi32>
    %c0_2 = arith.constant 0 : index
    %c0_3 = arith.constant 0 : index
    %c0_4 = arith.constant 0 : index
    %3 = vector.load %arg3[%c0_2, %c0_3, %c0_4] : memref<1x16x128xbf16, #tpu.memory_space<vmem>>, vector<1x16x128xbf16>
    %4 = vector.shape_cast %3 : vector<1x16x128xbf16> to vector<16x128xbf16>
    %c0_5 = arith.constant 0 : index
    %c0_6 = arith.constant 0 : index
    %c0_7 = arith.constant 0 : index
    %5 = vector.load %arg4[%c0_5, %c0_6, %c0_7] : memref<1x16x128xbf16, #tpu.memory_space<vmem>>, vector<1x16x128xbf16>
    %6 = vector.shape_cast %5 : vector<1x16x128xbf16> to vector<16x128xbf16>
    %7 = tpu.iota {dimensions = array<i32: 1>} : vector<1x128xi32>
    %8 = vector.broadcast %0 : i32 to vector<1x128xi32>
    %9 = arith.addi %7, %8 : vector<1x128xi32>
    %10 = tpu.iota {dimensions = array<i32: 0>} : vector<16x1xi32>
    %c7_i32 = arith.constant 7 : i32
    %11 = vector.broadcast %c7_i32 : i32 to vector<16x1xi32>
    %12 = arith.cmpi sge, %10, %11 : vector<16x1xi32>
    %c11_i32 = arith.constant 11 : i32
    %13 = vector.broadcast %c11_i32 : i32 to vector<16x1xi32>
    %14 = arith.cmpi slt, %10, %13 : vector<16x1xi32>
    %15 = arith.andi %12, %14 : vector<16x1xi1>
    %c9_i32 = arith.constant 9 : i32
    %16 = vector.broadcast %c9_i32 : i32 to vector<1x128xi32>
    %17 = arith.muli %9, %16 : vector<1x128xi32>
    %c0_i32 = arith.constant 0 : i32
    %18 = vector.broadcast %c0_i32 : i32 to vector<1x128xi32>
    %19 = arith.addi %17, %18 : vector<1x128xi32>
    %20 = vector.broadcast %2 : vector<128x1xi32> to vector<128x128xi32>
    %21 = vector.broadcast %19 : vector<1x128xi32> to vector<128x128xi32>
    %22 = arith.cmpi eq, %20, %21 : vector<128x128xi32>
    %cst = arith.constant 1.000000e+00 : f32
    %cst_8 = arith.constant 0.000000e+00 : f32
    %23 = vector.broadcast %cst : f32 to vector<128x128xf32>
    %24 = vector.broadcast %cst_8 : f32 to vector<128x128xf32>
    %25 = arith.select %22, %23, %24 : vector<128x128xi1>, vector<128x128xf32>
    %26 = arith.truncf %25 : vector<128x128xf32> to vector<128x128xbf16>
    %cst_9 = arith.constant dense<0.000000e+00> : vector<16x128xf32>
    %27 = tpu.matmul %4, %26, %cst_9 {dimension_numbers = #tpu.dot_dimension_numbers<[1], [0], [0], [1], [0, 0, 1, 1], [], []>} : vector<16x128xbf16>, vector<128x128xbf16>, vector<16x128xf32> -> vector<16x128xf32>
    %cst_10 = arith.constant dense<0.000000e+00> : vector<16x128xf32>
    %28 = tpu.matmul %6, %26, %cst_10 {dimension_numbers = #tpu.dot_dimension_numbers<[1], [0], [0], [1], [0, 0, 1, 1], [], []>} : vector<16x128xbf16>, vector<128x128xbf16>, vector<16x128xf32> -> vector<16x128xf32>
    %29 = arith.addf %27, %28 : vector<16x128xf32>
    %30 = vector.extract_strided_slice %29 {offsets = [11, 0], sizes = [1, 128], strides = [1, 1]} : vector<16x128xf32> to vector<1x128xf32>
    %cst_11 = arith.constant 1.000000e+00 : f32
    %31 = vector.broadcast %cst_11 : f32 to vector<1x128xf32>
    %32 = arith.subf %30, %31 : vector<1x128xf32>
    %cst_12 = arith.constant 0.000000e+00 : f32
    %33 = vector.shape_cast %15 : vector<16x1xi1> to vector<16x1xi1>
    %34 = vector.broadcast %33 : vector<16x1xi1> to vector<16x128xi1>
    %35 = vector.shape_cast %32 : vector<1x128xf32> to vector<1x128xf32>
    %36 = vector.broadcast %35 : vector<1x128xf32> to vector<16x128xf32>
    %37 = vector.broadcast %cst_12 : f32 to vector<16x128xf32>
    %38 = arith.select %34, %36, %37 : vector<16x128xi1>, vector<16x128xf32>
    %39 = arith.addf %29, %38 : vector<16x128xf32>
    %c0_13 = arith.constant 0 : index
    %c0_14 = arith.constant 0 : index
    %c0_15 = arith.constant 0 : index
    %c0_16 = arith.constant 0 : index
    %40 = vector.load %arg5[%c0_13, %c0_14, %c0_15, %c0_16] : memref<1x9x16x128xf32, #tpu.memory_space<vmem>>, vector<1x1x16x128xf32>
    %41 = vector.shape_cast %40 : vector<1x1x16x128xf32> to vector<16x128xf32>
    %42 = vector.shape_cast %39 : vector<16x128xf32> to vector<1x1x16x128xf32>
    tpu.vector_store %arg5[%c0_13, %c0_14, %c0_15, %c0_16], %42 {strides = array<i32>} : memref<1x9x16x128xf32, #tpu.memory_space<vmem>>, vector<1x1x16x128xf32>,
    %c9_i32_17 = arith.constant 9 : i32
    %43 = vector.broadcast %c9_i32_17 : i32 to vector<1x128xi32>
    %44 = arith.muli %9, %43 : vector<1x128xi32>
    %c1_i32 = arith.constant 1 : i32
    %45 = vector.broadcast %c1_i32 : i32 to vector<1x128xi32>
    %46 = arith.addi %44, %45 : vector<1x128xi32>
    %47 = vector.broadcast %2 : vector<128x1xi32> to vector<128x128xi32>
    %48 = vector.broadcast %46 : vector<1x128xi32> to vector<128x128xi32>
    %49 = arith.cmpi eq, %47, %48 : vector<128x128xi32>
    %cst_18 = arith.constant 1.000000e+00 : f32
    %cst_19 = arith.constant 0.000000e+00 : f32
    %50 = vector.broadcast %cst_18 : f32 to vector<128x128xf32>
    %51 = vector.broadcast %cst_19 : f32 to vector<128x128xf32>
    %52 = arith.select %49, %50, %51 : vector<128x128xi1>, vector<128x128xf32>
    %53 = arith.truncf %52 : vector<128x128xf32> to vector<128x128xbf16>
    %cst_20 = arith.constant dense<0.000000e+00> : vector<16x128xf32>
    %54 = tpu.matmul %4, %53, %cst_20 {dimension_numbers = #tpu.dot_dimension_numbers<[1], [0], [0], [1], [0, 0, 1, 1], [], []>} : vector<16x128xbf16>, vector<128x128xbf16>, vector<16x128xf32> -> vector<16x128xf32>
    %cst_21 = arith.constant dense<0.000000e+00> : vector<16x128xf32>
    %55 = tpu.matmul %6, %53, %cst_21 {dimension_numbers = #tpu.dot_dimension_numbers<[1], [0], [0], [1], [0, 0, 1, 1], [], []>} : vector<16x128xbf16>, vector<128x128xbf16>, vector<16x128xf32> -> vector<16x128xf32>
    %56 = arith.addf %54, %55 : vector<16x128xf32>
    %57 = vector.extract_strided_slice %56 {offsets = [11, 0], sizes = [1, 128], strides = [1, 1]} : vector<16x128xf32> to vector<1x128xf32>
    %cst_22 = arith.constant 1.000000e+00 : f32
    %58 = vector.broadcast %cst_22 : f32 to vector<1x128xf32>
    %59 = arith.subf %57, %58 : vector<1x128xf32>
    %cst_23 = arith.constant 0.000000e+00 : f32
    %60 = vector.shape_cast %15 : vector<16x1xi1> to vector<16x1xi1>
    %61 = vector.broadcast %60 : vector<16x1xi1> to vector<16x128xi1>
    %62 = vector.shape_cast %59 : vector<1x128xf32> to vector<1x128xf32>
    %63 = vector.broadcast %62 : vector<1x128xf32> to vector<16x128xf32>
    %64 = vector.broadcast %cst_23 : f32 to vector<16x128xf32>
    %65 = arith.select %61, %63, %64 : vector<16x128xi1>, vector<16x128xf32>
    %66 = arith.addf %56, %65 : vector<16x128xf32>
    %c0_24 = arith.constant 0 : index
    %c1 = arith.constant 1 : index
    %c0_25 = arith.constant 0 : index
    %c0_26 = arith.constant 0 : index
    %67 = vector.load %arg5[%c0_24, %c1, %c0_25, %c0_26] : memref<1x9x16x128xf32, #tpu.memory_space<vmem>>, vector<1x1x16x128xf32>
    %68 = vector.shape_cast %67 : vector<1x1x16x128xf32> to vector<16x128xf32>
    %69 = vector.shape_cast %66 : vector<16x128xf32> to vector<1x1x16x128xf32>
    tpu.vector_store %arg5[%c0_24, %c1, %c0_25, %c0_26], %69 {strides = array<i32>} : memref<1x9x16x128xf32, #tpu.memory_space<vmem>>, vector<1x1x16x128xf32>,
    %c9_i32_27 = arith.constant 9 : i32
    %70 = vector.broadcast %c9_i32_27 : i32 to vector<1x128xi32>
    %71 = arith.muli %9, %70 : vector<1x128xi32>
    %c2_i32 = arith.constant 2 : i32
    %72 = vector.broadcast %c2_i32 : i32 to vector<1x128xi32>
    %73 = arith.addi %71, %72 : vector<1x128xi32>
    %74 = vector.broadcast %2 : vector<128x1xi32> to vector<128x128xi32>
    %75 = vector.broadcast %73 : vector<1x128xi32> to vector<128x128xi32>
    %76 = arith.cmpi eq, %74, %75 : vector<128x128xi32>
    %cst_28 = arith.constant 1.000000e+00 : f32
    %cst_29 = arith.constant 0.000000e+00 : f32
    %77 = vector.broadcast %cst_28 : f32 to vector<128x128xf32>
    %78 = vector.broadcast %cst_29 : f32 to vector<128x128xf32>
    %79 = arith.select %76, %77, %78 : vector<128x128xi1>, vector<128x128xf32>
    %80 = arith.truncf %79 : vector<128x128xf32> to vector<128x128xbf16>
    %cst_30 = arith.constant dense<0.000000e+00> : vector<16x128xf32>
    %81 = tpu.matmul %4, %80, %cst_30 {dimension_numbers = #tpu.dot_dimension_numbers<[1], [0], [0], [1], [0, 0, 1, 1], [], []>} : vector<16x128xbf16>, vector<128x128xbf16>, vector<16x128xf32> -> vector<16x128xf32>
    %cst_31 = arith.constant dense<0.000000e+00> : vector<16x128xf32>
    %82 = tpu.matmul %6, %80, %cst_31 {dimension_numbers = #tpu.dot_dimension_numbers<[1], [0], [0], [1], [0, 0, 1, 1], [], []>} : vector<16x128xbf16>, vector<128x128xbf16>, vector<16x128xf32> -> vector<16x128xf32>
    %83 = arith.addf %81, %82 : vector<16x128xf32>
    %84 = vector.extract_strided_slice %83 {offsets = [11, 0], sizes = [1, 128], strides = [1, 1]} : vector<16x128xf32> to vector<1x128xf32>
    %cst_32 = arith.constant 1.000000e+00 : f32
    %85 = vector.broadcast %cst_32 : f32 to vector<1x128xf32>
    %86 = arith.subf %84, %85 : vector<1x128xf32>
    %cst_33 = arith.constant 0.000000e+00 : f32
    %87 = vector.shape_cast %15 : vector<16x1xi1> to vector<16x1xi1>
    %88 = vector.broadcast %87 : vector<16x1xi1> to vector<16x128xi1>
    %89 = vector.shape_cast %86 : vector<1x128xf32> to vector<1x128xf32>
    %90 = vector.broadcast %89 : vector<1x128xf32> to vector<16x128xf32>
    %91 = vector.broadcast %cst_33 : f32 to vector<16x128xf32>
    %92 = arith.select %88, %90, %91 : vector<16x128xi1>, vector<16x128xf32>
    %93 = arith.addf %83, %92 : vector<16x128xf32>
    %c0_34 = arith.constant 0 : index
    %c2 = arith.constant 2 : index
    %c0_35 = arith.constant 0 : index
    %c0_36 = arith.constant 0 : index
    %94 = vector.load %arg5[%c0_34, %c2, %c0_35, %c0_36] : memref<1x9x16x128xf32, #tpu.memory_space<vmem>>, vector<1x1x16x128xf32>
    %95 = vector.shape_cast %94 : vector<1x1x16x128xf32> to vector<16x128xf32>
    %96 = vector.shape_cast %93 : vector<16x128xf32> to vector<1x1x16x128xf32>
    tpu.vector_store %arg5[%c0_34, %c2, %c0_35, %c0_36], %96 {strides = array<i32>} : memref<1x9x16x128xf32, #tpu.memory_space<vmem>>, vector<1x1x16x128xf32>,
    %c9_i32_37 = arith.constant 9 : i32
    %97 = vector.broadcast %c9_i32_37 : i32 to vector<1x128xi32>
    %98 = arith.muli %9, %97 : vector<1x128xi32>
    %c3_i32 = arith.constant 3 : i32
    %99 = vector.broadcast %c3_i32 : i32 to vector<1x128xi32>
    %100 = arith.addi %98, %99 : vector<1x128xi32>
    %101 = vector.broadcast %2 : vector<128x1xi32> to vector<128x128xi32>
    %102 = vector.broadcast %100 : vector<1x128xi32> to vector<128x128xi32>
    %103 = arith.cmpi eq, %101, %102 : vector<128x128xi32>
    %cst_38 = arith.constant 1.000000e+00 : f32
    %cst_39 = arith.constant 0.000000e+00 : f32
    %104 = vector.broadcast %cst_38 : f32 to vector<128x128xf32>
    %105 = vector.broadcast %cst_39 : f32 to vector<128x128xf32>
    %106 = arith.select %103, %104, %105 : vector<128x128xi1>, vector<128x128xf32>
    %107 = arith.truncf %106 : vector<128x128xf32> to vector<128x128xbf16>
    %cst_40 = arith.constant dense<0.000000e+00> : vector<16x128xf32>
    %108 = tpu.matmul %4, %107, %cst_40 {dimension_numbers = #tpu.dot_dimension_numbers<[1], [0], [0], [1], [0, 0, 1, 1], [], []>} : vector<16x128xbf16>, vector<128x128xbf16>, vector<16x128xf32> -> vector<16x128xf32>
    %cst_41 = arith.constant dense<0.000000e+00> : vector<16x128xf32>
    %109 = tpu.matmul %6, %107, %cst_41 {dimension_numbers = #tpu.dot_dimension_numbers<[1], [0], [0], [1], [0, 0, 1, 1], [], []>} : vector<16x128xbf16>, vector<128x128xbf16>, vector<16x128xf32> -> vector<16x128xf32>
    %110 = arith.addf %108, %109 : vector<16x128xf32>
    %111 = vector.extract_strided_slice %110 {offsets = [11, 0], sizes = [1, 128], strides = [1, 1]} : vector<16x128xf32> to vector<1x128xf32>
    %cst_42 = arith.constant 1.000000e+00 : f32
    %112 = vector.broadcast %cst_42 : f32 to vector<1x128xf32>
    %113 = arith.subf %111, %112 : vector<1x128xf32>
    %cst_43 = arith.constant 0.000000e+00 : f32
    %114 = vector.shape_cast %15 : vector<16x1xi1> to vector<16x1xi1>
    %115 = vector.broadcast %114 : vector<16x1xi1> to vector<16x128xi1>
    %116 = vector.shape_cast %113 : vector<1x128xf32> to vector<1x128xf32>
    %117 = vector.broadcast %116 : vector<1x128xf32> to vector<16x128xf32>
    %118 = vector.broadcast %cst_43 : f32 to vector<16x128xf32>
    %119 = arith.select %115, %117, %118 : vector<16x128xi1>, vector<16x128xf32>
    %120 = arith.addf %110, %119 : vector<16x128xf32>
    %c0_44 = arith.constant 0 : index
    %c3 = arith.constant 3 : index
    %c0_45 = arith.constant 0 : index
    %c0_46 = arith.constant 0 : index
    %121 = vector.load %arg5[%c0_44, %c3, %c0_45, %c0_46] : memref<1x9x16x128xf32, #tpu.memory_space<vmem>>, vector<1x1x16x128xf32>
    %122 = vector.shape_cast %121 : vector<1x1x16x128xf32> to vector<16x128xf32>
    %123 = vector.shape_cast %120 : vector<16x128xf32> to vector<1x1x16x128xf32>
    tpu.vector_store %arg5[%c0_44, %c3, %c0_45, %c0_46], %123 {strides = array<i32>} : memref<1x9x16x128xf32, #tpu.memory_space<vmem>>, vector<1x1x16x128xf32>,
    %c9_i32_47 = arith.constant 9 : i32
    %124 = vector.broadcast %c9_i32_47 : i32 to vector<1x128xi32>
    %125 = arith.muli %9, %124 : vector<1x128xi32>
    %c4_i32 = arith.constant 4 : i32
    %126 = vector.broadcast %c4_i32 : i32 to vector<1x128xi32>
    %127 = arith.addi %125, %126 : vector<1x128xi32>
    %128 = vector.broadcast %2 : vector<128x1xi32> to vector<128x128xi32>
    %129 = vector.broadcast %127 : vector<1x128xi32> to vector<128x128xi32>
    %130 = arith.cmpi eq, %128, %129 : vector<128x128xi32>
    %cst_48 = arith.constant 1.000000e+00 : f32
    %cst_49 = arith.constant 0.000000e+00 : f32
    %131 = vector.broadcast %cst_48 : f32 to vector<128x128xf32>
    %132 = vector.broadcast %cst_49 : f32 to vector<128x128xf32>
    %133 = arith.select %130, %131, %132 : vector<128x128xi1>, vector<128x128xf32>
    %134 = arith.truncf %133 : vector<128x128xf32> to vector<128x128xbf16>
    %cst_50 = arith.constant dense<0.000000e+00> : vector<16x128xf32>
    %135 = tpu.matmul %4, %134, %cst_50 {dimension_numbers = #tpu.dot_dimension_numbers<[1], [0], [0], [1], [0, 0, 1, 1], [], []>} : vector<16x128xbf16>, vector<128x128xbf16>, vector<16x128xf32> -> vector<16x128xf32>
    %cst_51 = arith.constant dense<0.000000e+00> : vector<16x128xf32>
    %136 = tpu.matmul %6, %134, %cst_51 {dimension_numbers = #tpu.dot_dimension_numbers<[1], [0], [0], [1], [0, 0, 1, 1], [], []>} : vector<16x128xbf16>, vector<128x128xbf16>, vector<16x128xf32> -> vector<16x128xf32>
    %137 = arith.addf %135, %136 : vector<16x128xf32>
    %138 = vector.extract_strided_slice %137 {offsets = [11, 0], sizes = [1, 128], strides = [1, 1]} : vector<16x128xf32> to vector<1x128xf32>
    %cst_52 = arith.constant 1.000000e+00 : f32
    %139 = vector.broadcast %cst_52 : f32 to vector<1x128xf32>
    %140 = arith.subf %138, %139 : vector<1x128xf32>
    %cst_53 = arith.constant 0.000000e+00 : f32
    %141 = vector.shape_cast %15 : vector<16x1xi1> to vector<16x1xi1>
    %142 = vector.broadcast %141 : vector<16x1xi1> to vector<16x128xi1>
    %143 = vector.shape_cast %140 : vector<1x128xf32> to vector<1x128xf32>
    %144 = vector.broadcast %143 : vector<1x128xf32> to vector<16x128xf32>
    %145 = vector.broadcast %cst_53 : f32 to vector<16x128xf32>
    %146 = arith.select %142, %144, %145 : vector<16x128xi1>, vector<16x128xf32>
    %147 = arith.addf %137, %146 : vector<16x128xf32>
    %c0_54 = arith.constant 0 : index
    %c4 = arith.constant 4 : index
    %c0_55 = arith.constant 0 : index
    %c0_56 = arith.constant 0 : index
    %148 = vector.load %arg5[%c0_54, %c4, %c0_55, %c0_56] : memref<1x9x16x128xf32, #tpu.memory_space<vmem>>, vector<1x1x16x128xf32>
    %149 = vector.shape_cast %148 : vector<1x1x16x128xf32> to vector<16x128xf32>
    %150 = vector.shape_cast %147 : vector<16x128xf32> to vector<1x1x16x128xf32>
    tpu.vector_store %arg5[%c0_54, %c4, %c0_55, %c0_56], %150 {strides = array<i32>} : memref<1x9x16x128xf32, #tpu.memory_space<vmem>>, vector<1x1x16x128xf32>,
    %c9_i32_57 = arith.constant 9 : i32
    %151 = vector.broadcast %c9_i32_57 : i32 to vector<1x128xi32>
    %152 = arith.muli %9, %151 : vector<1x128xi32>
    %c5_i32 = arith.constant 5 : i32
    %153 = vector.broadcast %c5_i32 : i32 to vector<1x128xi32>
    %154 = arith.addi %152, %153 : vector<1x128xi32>
    %155 = vector.broadcast %2 : vector<128x1xi32> to vector<128x128xi32>
    %156 = vector.broadcast %154 : vector<1x128xi32> to vector<128x128xi32>
    %157 = arith.cmpi eq, %155, %156 : vector<128x128xi32>
    %cst_58 = arith.constant 1.000000e+00 : f32
    %cst_59 = arith.constant 0.000000e+00 : f32
    %158 = vector.broadcast %cst_58 : f32 to vector<128x128xf32>
    %159 = vector.broadcast %cst_59 : f32 to vector<128x128xf32>
    %160 = arith.select %157, %158, %159 : vector<128x128xi1>, vector<128x128xf32>
    %161 = arith.truncf %160 : vector<128x128xf32> to vector<128x128xbf16>
    %cst_60 = arith.constant dense<0.000000e+00> : vector<16x128xf32>
    %162 = tpu.matmul %4, %161, %cst_60 {dimension_numbers = #tpu.dot_dimension_numbers<[1], [0], [0], [1], [0, 0, 1, 1], [], []>} : vector<16x128xbf16>, vector<128x128xbf16>, vector<16x128xf32> -> vector<16x128xf32>
    %cst_61 = arith.constant dense<0.000000e+00> : vector<16x128xf32>
    %163 = tpu.matmul %6, %161, %cst_61 {dimension_numbers = #tpu.dot_dimension_numbers<[1], [0], [0], [1], [0, 0, 1, 1], [], []>} : vector<16x128xbf16>, vector<128x128xbf16>, vector<16x128xf32> -> vector<16x128xf32>
    %164 = arith.addf %162, %163 : vector<16x128xf32>
    %165 = vector.extract_strided_slice %164 {offsets = [11, 0], sizes = [1, 128], strides = [1, 1]} : vector<16x128xf32> to vector<1x128xf32>
    %cst_62 = arith.constant 1.000000e+00 : f32
    %166 = vector.broadcast %cst_62 : f32 to vector<1x128xf32>
    %167 = arith.subf %165, %166 : vector<1x128xf32>
    %cst_63 = arith.constant 0.000000e+00 : f32
    %168 = vector.shape_cast %15 : vector<16x1xi1> to vector<16x1xi1>
    %169 = vector.broadcast %168 : vector<16x1xi1> to vector<16x128xi1>
    %170 = vector.shape_cast %167 : vector<1x128xf32> to vector<1x128xf32>
    %171 = vector.broadcast %170 : vector<1x128xf32> to vector<16x128xf32>
    %172 = vector.broadcast %cst_63 : f32 to vector<16x128xf32>
    %173 = arith.select %169, %171, %172 : vector<16x128xi1>, vector<16x128xf32>
    %174 = arith.addf %164, %173 : vector<16x128xf32>
    %c0_64 = arith.constant 0 : index
    %c5 = arith.constant 5 : index
    %c0_65 = arith.constant 0 : index
    %c0_66 = arith.constant 0 : index
    %175 = vector.load %arg5[%c0_64, %c5, %c0_65, %c0_66] : memref<1x9x16x128xf32, #tpu.memory_space<vmem>>, vector<1x1x16x128xf32>
    %176 = vector.shape_cast %175 : vector<1x1x16x128xf32> to vector<16x128xf32>
    %177 = vector.shape_cast %174 : vector<16x128xf32> to vector<1x1x16x128xf32>
    tpu.vector_store %arg5[%c0_64, %c5, %c0_65, %c0_66], %177 {strides = array<i32>} : memref<1x9x16x128xf32, #tpu.memory_space<vmem>>, vector<1x1x16x128xf32>,
    %c9_i32_67 = arith.constant 9 : i32
    %178 = vector.broadcast %c9_i32_67 : i32 to vector<1x128xi32>
    %179 = arith.muli %9, %178 : vector<1x128xi32>
    %c6_i32 = arith.constant 6 : i32
    %180 = vector.broadcast %c6_i32 : i32 to vector<1x128xi32>
    %181 = arith.addi %179, %180 : vector<1x128xi32>
    %182 = vector.broadcast %2 : vector<128x1xi32> to vector<128x128xi32>
    %183 = vector.broadcast %181 : vector<1x128xi32> to vector<128x128xi32>
    %184 = arith.cmpi eq, %182, %183 : vector<128x128xi32>
    %cst_68 = arith.constant 1.000000e+00 : f32
    %cst_69 = arith.constant 0.000000e+00 : f32
    %185 = vector.broadcast %cst_68 : f32 to vector<128x128xf32>
    %186 = vector.broadcast %cst_69 : f32 to vector<128x128xf32>
    %187 = arith.select %184, %185, %186 : vector<128x128xi1>, vector<128x128xf32>
    %188 = arith.truncf %187 : vector<128x128xf32> to vector<128x128xbf16>
    %cst_70 = arith.constant dense<0.000000e+00> : vector<16x128xf32>
    %189 = tpu.matmul %4, %188, %cst_70 {dimension_numbers = #tpu.dot_dimension_numbers<[1], [0], [0], [1], [0, 0, 1, 1], [], []>} : vector<16x128xbf16>, vector<128x128xbf16>, vector<16x128xf32> -> vector<16x128xf32>
    %cst_71 = arith.constant dense<0.000000e+00> : vector<16x128xf32>
    %190 = tpu.matmul %6, %188, %cst_71 {dimension_numbers = #tpu.dot_dimension_numbers<[1], [0], [0], [1], [0, 0, 1, 1], [], []>} : vector<16x128xbf16>, vector<128x128xbf16>, vector<16x128xf32> -> vector<16x128xf32>
    %191 = arith.addf %189, %190 : vector<16x128xf32>
    %192 = vector.extract_strided_slice %191 {offsets = [11, 0], sizes = [1, 128], strides = [1, 1]} : vector<16x128xf32> to vector<1x128xf32>
    %cst_72 = arith.constant 1.000000e+00 : f32
    %193 = vector.broadcast %cst_72 : f32 to vector<1x128xf32>
    %194 = arith.subf %192, %193 : vector<1x128xf32>
    %cst_73 = arith.constant 0.000000e+00 : f32
    %195 = vector.shape_cast %15 : vector<16x1xi1> to vector<16x1xi1>
    %196 = vector.broadcast %195 : vector<16x1xi1> to vector<16x128xi1>
    %197 = vector.shape_cast %194 : vector<1x128xf32> to vector<1x128xf32>
    %198 = vector.broadcast %197 : vector<1x128xf32> to vector<16x128xf32>
    %199 = vector.broadcast %cst_73 : f32 to vector<16x128xf32>
    %200 = arith.select %196, %198, %199 : vector<16x128xi1>, vector<16x128xf32>
    %201 = arith.addf %191, %200 : vector<16x128xf32>
    %c0_74 = arith.constant 0 : index
    %c6 = arith.constant 6 : index
    %c0_75 = arith.constant 0 : index
    %c0_76 = arith.constant 0 : index
    %202 = vector.load %arg5[%c0_74, %c6, %c0_75, %c0_76] : memref<1x9x16x128xf32, #tpu.memory_space<vmem>>, vector<1x1x16x128xf32>
    %203 = vector.shape_cast %202 : vector<1x1x16x128xf32> to vector<16x128xf32>
    %204 = vector.shape_cast %201 : vector<16x128xf32> to vector<1x1x16x128xf32>
    tpu.vector_store %arg5[%c0_74, %c6, %c0_75, %c0_76], %204 {strides = array<i32>} : memref<1x9x16x128xf32, #tpu.memory_space<vmem>>, vector<1x1x16x128xf32>,
    %c9_i32_77 = arith.constant 9 : i32
    %205 = vector.broadcast %c9_i32_77 : i32 to vector<1x128xi32>
    %206 = arith.muli %9, %205 : vector<1x128xi32>
    %c7_i32_78 = arith.constant 7 : i32
    %207 = vector.broadcast %c7_i32_78 : i32 to vector<1x128xi32>
    %208 = arith.addi %206, %207 : vector<1x128xi32>
    %209 = vector.broadcast %2 : vector<128x1xi32> to vector<128x128xi32>
    %210 = vector.broadcast %208 : vector<1x128xi32> to vector<128x128xi32>
    %211 = arith.cmpi eq, %209, %210 : vector<128x128xi32>
    %cst_79 = arith.constant 1.000000e+00 : f32
    %cst_80 = arith.constant 0.000000e+00 : f32
    %212 = vector.broadcast %cst_79 : f32 to vector<128x128xf32>
    %213 = vector.broadcast %cst_80 : f32 to vector<128x128xf32>
    %214 = arith.select %211, %212, %213 : vector<128x128xi1>, vector<128x128xf32>
    %215 = arith.truncf %214 : vector<128x128xf32> to vector<128x128xbf16>
    %cst_81 = arith.constant dense<0.000000e+00> : vector<16x128xf32>
    %216 = tpu.matmul %4, %215, %cst_81 {dimension_numbers = #tpu.dot_dimension_numbers<[1], [0], [0], [1], [0, 0, 1, 1], [], []>} : vector<16x128xbf16>, vector<128x128xbf16>, vector<16x128xf32> -> vector<16x128xf32>
    %cst_82 = arith.constant dense<0.000000e+00> : vector<16x128xf32>
    %217 = tpu.matmul %6, %215, %cst_82 {dimension_numbers = #tpu.dot_dimension_numbers<[1], [0], [0], [1], [0, 0, 1, 1], [], []>} : vector<16x128xbf16>, vector<128x128xbf16>, vector<16x128xf32> -> vector<16x128xf32>
    %218 = arith.addf %216, %217 : vector<16x128xf32>
    %219 = vector.extract_strided_slice %218 {offsets = [11, 0], sizes = [1, 128], strides = [1, 1]} : vector<16x128xf32> to vector<1x128xf32>
    %cst_83 = arith.constant 1.000000e+00 : f32
    %220 = vector.broadcast %cst_83 : f32 to vector<1x128xf32>
    %221 = arith.subf %219, %220 : vector<1x128xf32>
    %cst_84 = arith.constant 0.000000e+00 : f32
    %222 = vector.shape_cast %15 : vector<16x1xi1> to vector<16x1xi1>
    %223 = vector.broadcast %222 : vector<16x1xi1> to vector<16x128xi1>
    %224 = vector.shape_cast %221 : vector<1x128xf32> to vector<1x128xf32>
    %225 = vector.broadcast %224 : vector<1x128xf32> to vector<16x128xf32>
    %226 = vector.broadcast %cst_84 : f32 to vector<16x128xf32>
    %227 = arith.select %223, %225, %226 : vector<16x128xi1>, vector<16x128xf32>
    %228 = arith.addf %218, %227 : vector<16x128xf32>
    %c0_85 = arith.constant 0 : index
    %c7 = arith.constant 7 : index
    %c0_86 = arith.constant 0 : index
    %c0_87 = arith.constant 0 : index
    %229 = vector.load %arg5[%c0_85, %c7, %c0_86, %c0_87] : memref<1x9x16x128xf32, #tpu.memory_space<vmem>>, vector<1x1x16x128xf32>
    %230 = vector.shape_cast %229 : vector<1x1x16x128xf32> to vector<16x128xf32>
    %231 = vector.shape_cast %228 : vector<16x128xf32> to vector<1x1x16x128xf32>
    tpu.vector_store %arg5[%c0_85, %c7, %c0_86, %c0_87], %231 {strides = array<i32>} : memref<1x9x16x128xf32, #tpu.memory_space<vmem>>, vector<1x1x16x128xf32>,
    %c9_i32_88 = arith.constant 9 : i32
    %232 = vector.broadcast %c9_i32_88 : i32 to vector<1x128xi32>
    %233 = arith.muli %9, %232 : vector<1x128xi32>
    %c8_i32 = arith.constant 8 : i32
    %234 = vector.broadcast %c8_i32 : i32 to vector<1x128xi32>
    %235 = arith.addi %233, %234 : vector<1x128xi32>
    %236 = vector.broadcast %2 : vector<128x1xi32> to vector<128x128xi32>
    %237 = vector.broadcast %235 : vector<1x128xi32> to vector<128x128xi32>
    %238 = arith.cmpi eq, %236, %237 : vector<128x128xi32>
    %cst_89 = arith.constant 1.000000e+00 : f32
    %cst_90 = arith.constant 0.000000e+00 : f32
    %239 = vector.broadcast %cst_89 : f32 to vector<128x128xf32>
    %240 = vector.broadcast %cst_90 : f32 to vector<128x128xf32>
    %241 = arith.select %238, %239, %240 : vector<128x128xi1>, vector<128x128xf32>
    %242 = arith.truncf %241 : vector<128x128xf32> to vector<128x128xbf16>
    %cst_91 = arith.constant dense<0.000000e+00> : vector<16x128xf32>
    %243 = tpu.matmul %4, %242, %cst_91 {dimension_numbers = #tpu.dot_dimension_numbers<[1], [0], [0], [1], [0, 0, 1, 1], [], []>} : vector<16x128xbf16>, vector<128x128xbf16>, vector<16x128xf32> -> vector<16x128xf32>
    %cst_92 = arith.constant dense<0.000000e+00> : vector<16x128xf32>
    %244 = tpu.matmul %6, %242, %cst_92 {dimension_numbers = #tpu.dot_dimension_numbers<[1], [0], [0], [1], [0, 0, 1, 1], [], []>} : vector<16x128xbf16>, vector<128x128xbf16>, vector<16x128xf32> -> vector<16x128xf32>
    %245 = arith.addf %243, %244 : vector<16x128xf32>
    %246 = vector.extract_strided_slice %245 {offsets = [11, 0], sizes = [1, 128], strides = [1, 1]} : vector<16x128xf32> to vector<1x128xf32>
    %cst_93 = arith.constant 1.000000e+00 : f32
    %247 = vector.broadcast %cst_93 : f32 to vector<1x128xf32>
    %248 = arith.subf %246, %247 : vector<1x128xf32>
    %cst_94 = arith.constant 0.000000e+00 : f32
    %249 = vector.shape_cast %15 : vector<16x1xi1> to vector<16x1xi1>
    %250 = vector.broadcast %249 : vector<16x1xi1> to vector<16x128xi1>
    %251 = vector.shape_cast %248 : vector<1x128xf32> to vector<1x128xf32>
    %252 = vector.broadcast %251 : vector<1x128xf32> to vector<16x128xf32>
    %253 = vector.broadcast %cst_94 : f32 to vector<16x128xf32>
    %254 = arith.select %250, %252, %253 : vector<16x128xi1>, vector<16x128xf32>
    %255 = arith.addf %245, %254 : vector<16x128xf32>
    %c0_95 = arith.constant 0 : index
    %c8 = arith.constant 8 : index
    %c0_96 = arith.constant 0 : index
    %c0_97 = arith.constant 0 : index
    %256 = vector.load %arg5[%c0_95, %c8, %c0_96, %c0_97] : memref<1x9x16x128xf32, #tpu.memory_space<vmem>>, vector<1x1x16x128xf32>
    %257 = vector.shape_cast %256 : vector<1x1x16x128xf32> to vector<16x128xf32>
    %258 = vector.shape_cast %255 : vector<16x128xf32> to vector<1x1x16x128xf32>
    tpu.vector_store %arg5[%c0_95, %c8, %c0_96, %c0_97], %258 {strides = array<i32>} : memref<1x9x16x128xf32, #tpu.memory_space<vmem>>, vector<1x1x16x128xf32>,
    return
  }
  func.func @transform_0(%arg0: i32, %arg1: i32) -> (i32, i32, i32) {
    %c0_i32 = arith.constant 0 : i32
    %c0_i32_0 = arith.constant 0 : i32
    %c0_i32_1 = arith.constant 0 : i32
    return %arg0, %c0_i32, %c0_i32_0 : i32, i32, i32
  }
  func.func @transform_1(%arg0: i32, %arg1: i32) -> (i32, i32, i32) {
    %c0_i32 = arith.constant 0 : i32
    %c0_i32_0 = arith.constant 0 : i32
    %c0_i32_1 = arith.constant 0 : i32
    return %arg0, %c0_i32, %c0_i32_0 : i32, i32, i32
  }
  func.func @transform_2(%arg0: i32, %arg1: i32) -> (i32, i32, i32) {
    %c0_i32 = arith.constant 0 : i32
    %c0_i32_0 = arith.constant 0 : i32
    %c0_i32_1 = arith.constant 0 : i32
    return %arg0, %c0_i32, %c0_i32_0 : i32, i32, i32
  }
  func.func @transform_3(%arg0: i32, %arg1: i32) -> (i32, i32, i32, i32) {
    %c0_i32 = arith.constant 0 : i32
    %c0_i32_0 = arith.constant 0 : i32
    %c0_i32_1 = arith.constant 0 : i32
    return %arg0, %c0_i32, %c0_i32_0, %arg1 : i32, i32, i32, i32
  }
}

</mosaic_0001>

<llo_original>
// kernel: tpu_custom_call.1
$region0: #{tpu_custom_call.1}
  #allocation0 [shape = 'u32[]', space=smem, size = 0x4, offset = 0x4, fixed_abs, tag = 'smem constant byte address 0x4 - core index']
  #allocation1 [shape = 'u32[144,128]{1,0:T(1,128)}', space=vmem, size = 0x12000, scoped, tag = 'internal scratch']
  %s0 = inlined_call_operand.vmem [shape: s32[2,128,1], index: 0, kind: input, shape index: {}]
  %s1 = inlined_call_operand.vmem [shape: bf16[2,16,128], index: 1, kind: input, shape index: {}]
  %s2 = inlined_call_operand.vmem [shape: bf16[2,16,128], index: 2, kind: input, shape index: {}]
  %s3 = inlined_call_operand.hbm [shape: f32[2,9,16,128], index: 3, kind: output, shape index: {}]
  %s4 = sld [smem:[#allocation0]]
  $region45: #{tpu_custom_call.1} parent=0
    _
  %s6 = ssub.s32 1, %s4
  %s7 = scalar_select 0, %s6, %s4
  $region1: #{tpu_custom_call.1} parent=0
    #allocation2 [shape = 'u8[147456]{0}', space=vmem, size = 0x24000, scoped, tag = 'output window, operand 0']
    #allocation3 [shape = 's32[2]{0}', space=sflag, size = 0x8, scoped, tag = 'scoped memory for tpu_custom_call.1']
    %8 = vsyncpa [#allocation3], 0
    %s9 = scalar_lea.sflag [#allocation3], 1
    %10 = vsyncpa %s9, 0
    loop: start=0, step=1, limit=4
    $region2: #{tpu_custom_call.1} parent=1 // loop_pre_header
      _
    $region3: #{tpu_custom_call.1} parent=1 // loop_header
      %s12 = sphi 0, %s16
      %p13 = scmp.ge.s32.totalorder %s12, 4
      %s19 = sphi 0, %s31
      %s20 = sphi 0, %s27
      %s21 = sphi 0, %s19
      %s22 = sphi 0, %s20
      %s23 = sphi 0, %s21
      %s24 = sphi 0, %s22
      %s34 = sphi 0, %s36
      %s37 = sphi 0, %s34
      %s38 = sphi 0, %s37
      %s54 = sphi 0, %s38
      %s60 = sphi 0, %s62
      %s63 = sphi 0, %s60
      %s64 = sphi 0, %s63
      %s80 = sphi 0, %s64
      %s86 = sphi 0, %s88
      %s89 = sphi 0, %s86
      %s90 = sphi 0, %s89
      %s106 = sphi 0, %s90
      %s114 = sphi 0, %s116
      %s117 = sphi 0, %s114
      %s118 = sphi 0, %s117
      %s134 = sphi 0, %s118
    $region4: #{tpu_custom_call.1} parent=1 // loop_header_branch
      %15 = sbr.rel (%p13) target = $region8
    $region5: #{tpu_custom_call.1} parent=1 // loop_body
      %s17 = ssub.s32 %s12, 1
      %s18 = ssub.s32 %s12, 2
      %s25 = sadd.s32 1, %s20
      %p26 = scmp.ge.s32.totalorder %s25, 1
      %s27 = scalar_select %p26, 0, %s25
      %s28 = sadd.s32 1, %s19
      %s29 = scalar_select %p26, %s28, %s19
      %p30 = scmp.ge.s32.totalorder %s29, 2
      %s31 = scalar_select %p30, 0, %s29
      %s32 = ssub.s32 %s19, %s31
      %p33 = scmp.eq.s32.totalorder %s32, 0
      %s35 = sadd.s32 %s34, 1
      %s36 = scalar_select %p33, %s34, %s35
      %p39 = pneg %p33
      %p40 = scmp.eq.s32.totalorder %s12, 1
      %p41 = por %p39, %p40
      %p42 = scmp.ne.s32.totalorder %s34, %s37
      %p43 = scmp.eq.s32.totalorder %s12, 0
      %p44 = por %p42, %p43
      %p45 = scmp.ne.s32.totalorder %s34, %s37
      %p46 = scmp.eq.s32.totalorder %s17, 1
      %p47 = por %p45, %p46
      %p48 = scmp.ne.s32.totalorder %s37, %s38
      %p49 = scmp.eq.s32.totalorder %s17, 0
      %p50 = por %p48, %p49
      %p51 = scmp.ne.s32.totalorder %s37, %s38
      %p52 = scmp.eq.s32.totalorder %s18, 1
      %p53 = por %p51, %p52
      %p55 = scmp.ne.s32.totalorder %s38, %s54
      %p56 = scmp.eq.s32.totalorder %s18, 0
      %p57 = por %p55, %p56
      %s58 = ssub.s32 %s19, %s31
      %p59 = scmp.eq.s32.totalorder %s58, 0
      %s61 = sadd.s32 %s60, 1
      %s62 = scalar_select %p59, %s60, %s61
      %p65 = pneg %p59
      %p66 = scmp.eq.s32.totalorder %s12, 1
      %p67 = por %p65, %p66
      %p68 = scmp.ne.s32.totalorder %s60, %s63
      %p69 = scmp.eq.s32.totalorder %s12, 0
      %p70 = por %p68, %p69
      %p71 = scmp.ne.s32.totalorder %s60, %s63
      %p72 = scmp.eq.s32.totalorder %s17, 1
      %p73 = por %p71, %p72
      %p74 = scmp.ne.s32.totalorder %s63, %s64
      %p75 = scmp.eq.s32.totalorder %s17, 0
      %p76 = por %p74, %p75
      %p77 = scmp.ne.s32.totalorder %s63, %s64
      %p78 = scmp.eq.s32.totalorder %s18, 1
      %p79 = por %p77, %p78
      %p81 = scmp.ne.s32.totalorder %s64, %s80
      %p82 = scmp.eq.s32.totalorder %s18, 0
      %p83 = por %p81, %p82
      %s84 = ssub.s32 %s19, %s31
      %p85 = scmp.eq.s32.totalorder %s84, 0
      %s87 = sadd.s32 %s86, 1
      %s88 = scalar_select %p85, %s86, %s87
      %p91 = pneg %p85
      %p92 = scmp.eq.s32.totalorder %s12, 1
      %p93 = por %p91, %p92
      %p94 = scmp.ne.s32.totalorder %s86, %s89
      %p95 = scmp.eq.s32.totalorder %s12, 0
      %p96 = por %p94, %p95
      %p97 = scmp.ne.s32.totalorder %s86, %s89
      %p98 = scmp.eq.s32.totalorder %s17, 1
      %p99 = por %p97, %p98
      %p100 = scmp.ne.s32.totalorder %s89, %s90
      %p101 = scmp.eq.s32.totalorder %s17, 0
      %p102 = por %p100, %p101
      %p103 = scmp.ne.s32.totalorder %s89, %s90
      %p104 = scmp.eq.s32.totalorder %s18, 1
      %p105 = por %p103, %p104
      %p107 = scmp.ne.s32.totalorder %s90, %s106
      %p108 = scmp.eq.s32.totalorder %s18, 0
      %p109 = por %p107, %p108
      %s110 = ssub.s32 %s19, %s31
      %s111 = ssub.s32 %s20, %s27
      %s112 = sor.u32 %s110, %s111
      %p113 = scmp.eq.s32.totalorder %s112, 0
      %s115 = sadd.s32 %s114, 1
      %s116 = scalar_select %p113, %s114, %s115
      %p119 = pneg %p113
      %p120 = scmp.eq.s32.totalorder %s12, 1
      %p121 = por %p119, %p120
      %p122 = scmp.ne.s32.totalorder %s114, %s117
      %p123 = scmp.eq.s32.totalorder %s12, 0
      %p124 = por %p122, %p123
      %p125 = scmp.ne.s32.totalorder %s114, %s117
      %p126 = scmp.eq.s32.totalorder %s17, 1
      %p127 = por %p125, %p126
      %p128 = scmp.ne.s32.totalorder %s117, %s118
      %p129 = scmp.eq.s32.totalorder %s17, 0
      %p130 = por %p128, %p129
      %p131 = scmp.ne.s32.totalorder %s117, %s118
      %p132 = scmp.eq.s32.totalorder %s18, 1
      %p133 = por %p131, %p132
      %p135 = scmp.ne.s32.totalorder %s118, %s134
      %p136 = scmp.eq.s32.totalorder %s18, 0
      %p137 = por %p135, %p136
      %p138 = scmp.le.s32.totalorder 1, %s12
      %p139 = scmp.lt.s32.totalorder %s12, 3
      %p140 = pnand %p138, %p139
      %p141 = pneg %p140
      // Predicated region
      $region9: #{tpu_custom_call.1} parent=5 // pred_check
        _
      $region10: #{tpu_custom_call.1} parent=5 // pred_check_branch
        %143 = sbr.rel (%p140) target = $region12
      $region11: #{tpu_custom_call.1} parent=5 // pred_region
        %s144 = ssub.s32 %s12, 1
      $region12: #{tpu_custom_call.1} parent=5 // pred_fallthru
        _
      %p145 = scmp.lt.s32.totalorder %s12, 2
      // Predicated region
      $region13: #{tpu_custom_call.1} parent=5 // pred_check
        %p146 = pneg %p145
      $region14: #{tpu_custom_call.1} parent=5 // pred_check_branch
        %148 = sbr.rel (%p146) target = $region16
      $region15: #{tpu_custom_call.1} parent=5 // pred_region
        // Predicated region
        $region17: #{tpu_custom_call.1} parent=15 // pred_check
          %p149 = pneg %p44
        $region18: #{tpu_custom_call.1} parent=15 // pred_check_branch
          %151 = sbr.rel (%p149) target = $region20
        $region19: #{tpu_custom_call.1} parent=15 // pred_region
          %p152 = scmp.lt.s32.totalorder %s19, 1
          %s153 = scalar_select %p152, %s19, 1
          %s154 = smul.addr %s153, 16
          %s155 = smul.addr %s154, 8
          %s156 = scalar_lea.vmem %s0, %s155
        $region20: #{tpu_custom_call.1} parent=15 // pred_fallthru
          _
        // Predicated region
        $region21: #{tpu_custom_call.1} parent=15 // pred_check
          %p157 = pneg %p70
        $region22: #{tpu_custom_call.1} parent=15 // pred_check_branch
          %159 = sbr.rel (%p157) target = $region24
        $region23: #{tpu_custom_call.1} parent=15 // pred_region
          %p160 = scmp.lt.s32.totalorder %s19, 1
          %s161 = scalar_select %p160, %s19, 1
          %s162 = smul.addr %s161, 2
          %s163 = smul.addr %s162, 4
          %s164 = scalar_lea.vmem %s1, %s163
        $region24: #{tpu_custom_call.1} parent=15 // pred_fallthru
          _
        // Predicated region
        $region25: #{tpu_custom_call.1} parent=15 // pred_check
          %p165 = pneg %p96
        $region26: #{tpu_custom_call.1} parent=15 // pred_check_branch
          %167 = sbr.rel (%p165) target = $region28
        $region27: #{tpu_custom_call.1} parent=15 // pred_region
          %p168 = scmp.lt.s32.totalorder %s19, 1
          %s169 = scalar_select %p168, %s19, 1
          %s170 = smul.addr %s169, 2
          %s171 = smul.addr %s170, 4
          %s172 = scalar_lea.vmem %s2, %s171
        $region28: #{tpu_custom_call.1} parent=15 // pred_fallthru
          _
      $region16: #{tpu_custom_call.1} parent=5 // pred_fallthru
        _
      %p173 = scmp.le.s32.totalorder 1, %s12
      %p174 = scmp.lt.s32.totalorder %s12, 3
      %p175 = pnand %p173, %p174
      %p176 = pneg %p175
      // Predicated region
      $region29: #{tpu_custom_call.1} parent=5 // pred_check
        _
      $region30: #{tpu_custom_call.1} parent=5 // pred_check_branch
        %178 = sbr.rel (%p175) target = $region32
      $region31: #{tpu_custom_call.1} parent=5 // pred_region
        %s179 = ssub.s32 %s12, 1
        %p180 = scmp.lt.s32.totalorder %s21, 1
        %s181 = scalar_select %p180, %s21, 1
        %s182 = smul.addr %s181, 16
        %s183 = smul.addr %s182, 8
        %s184 = scalar_lea.vmem %s0, %s183
        %p185 = pneg %p50
        %p186 = pneg %p47
        %p187 = scmp.lt.s32.totalorder %s21, 1
        %s188 = scalar_select %p187, %s21, 1
        %s189 = smul.addr %s188, 2
        %s190 = smul.addr %s189, 4
        %s191 = scalar_lea.vmem %s1, %s190
        %p192 = pneg %p76
        %p193 = pneg %p73
        %p194 = scmp.lt.s32.totalorder %s21, 1
        %s195 = scalar_select %p194, %s21, 1
        %s196 = smul.addr %s195, 2
        %s197 = smul.addr %s196, 4
        %s198 = scalar_lea.vmem %s2, %s197
        %p199 = pneg %p102
        %p200 = pneg %p99
        %p201 = pneg %p130
        %p202 = pneg %p127
        %s203 = sand.u32 %s117, 1
        %s204 = scalar_lea.sflag [#allocation3], %s203
        %s205 = sand.u32 %s117, 1
        %s206 = smul.addr %s205, 144
        %s207 = scalar_lea.vmem [#allocation2], %s206
        %p208 = scmp.lt.s32.totalorder %s21, 1
        %s209 = scalar_select %p208, %s21, 1
        %s210 = smul.addr %s209, 16
        %s211 = smul.addr %s210, 8
        %s212 = scalar_lea.vmem %s0, %s211
        %p213 = scmp.lt.s32.totalorder %s21, 1
        %s214 = scalar_select %p213, %s21, 1
        %s215 = smul.addr %s214, 2
        %s216 = smul.addr %s215, 4
        %s217 = scalar_lea.vmem %s1, %s216
        %p218 = scmp.lt.s32.totalorder %s21, 1
        %s219 = scalar_select %p218, %s21, 1
        %s220 = smul.addr %s219, 2
        %s221 = smul.addr %s220, 4
        %s222 = scalar_lea.vmem %s2, %s221
        %s224 = smul.u32 %s22, 128
        %v225 = vld [vmem:[%s212] sm:$0xff]
        %v226 = vld [vmem:[%s212 + $0x8] sm:$0xff]
        %v227 = vld [vmem:[%s212 + $0x10] sm:$0xff]
        %v228 = vld [vmem:[%s212 + $0x18] sm:$0xff]
        %v229 = vld [vmem:[%s212 + $0x20] sm:$0xff]
        %v230 = vld [vmem:[%s212 + $0x28] sm:$0xff]
        %v231 = vld [vmem:[%s212 + $0x30] sm:$0xff]
        %v232 = vld [vmem:[%s212 + $0x38] sm:$0xff]
        %v233 = vld [vmem:[%s212 + $0x40] sm:$0xff]
        %v234 = vld [vmem:[%s212 + $0x48] sm:$0xff]
        %v235 = vld [vmem:[%s212 + $0x50] sm:$0xff]
        %v236 = vld [vmem:[%s212 + $0x58] sm:$0xff]
        %v237 = vld [vmem:[%s212 + $0x60] sm:$0xff]
        %v238 = vld [vmem:[%s212 + $0x68] sm:$0xff]
        %v239 = vld [vmem:[%s212 + $0x70] sm:$0xff]
        %v240 = vld [vmem:[%s212 + $0x78] sm:$0xff]
        %v241 = vld [vmem:[%s217] sm:$0xf]
        %v242 = vld [vmem:[%s217 + $0x4] sm:$0xf]
        %v243 = vld [vmem:[%s222] sm:$0xf]
        %v244 = vld [vmem:[%s222 + $0x4] sm:$0xf]
        %v245 = vlaneseq
        %v246 = vand.u32 %v245, 127
        %v247 = vstv %s224
        %v248 = vadd.s32 %v246, %v247
        %v249 = vlaneseq
        %v250 = vshrl.u32 %v249, 7
        %v251 = vadd.s32 %v250, 8
        %vm252 = vcmp.ge.s32.totalorder %v250, 7
        %vm253 = vcmp.ge.s32.totalorder %v251, 7
        %vm254 = vcmp.lt.s32.totalorder %v250, 11
        %vm255 = vcmp.lt.s32.totalorder %v251, 11
        %vm256 = vmand %vm252, %vm254
        %vm257 = vmand %vm253, %vm255
        %v258 = vmul.u32 %v248, 9
        %259 = vset.pattern.permute.xlu0 0
        %260 = vperm.xlu0 %259, %v225
        %v261 = vpop.permute.xlu0 %260
        %262 = vset.pattern.permute.xlu0 0
        %263 = vperm.xlu0 %262, %v226
        %v264 = vpop.permute.xlu0 %263
        %265 = vset.pattern.permute.xlu0 0
        %266 = vperm.xlu0 %265, %v227
        %v267 = vpop.permute.xlu0 %266
        %268 = vset.pattern.permute.xlu0 0
        %269 = vperm.xlu0 %268, %v228
        %v270 = vpop.permute.xlu0 %269
        %271 = vset.pattern.permute.xlu0 0
        %272 = vperm.xlu0 %271, %v229
        %v273 = vpop.permute.xlu0 %272
        %274 = vset.pattern.permute.xlu0 0
        %275 = vperm.xlu0 %274, %v230
        %v276 = vpop.permute.xlu0 %275
        %277 = vset.pattern.permute.xlu0 0
        %278 = vperm.xlu0 %277, %v231
        %v279 = vpop.permute.xlu0 %278
        %280 = vset.pattern.permute.xlu0 0
        %281 = vperm.xlu0 %280, %v232
        %v282 = vpop.permute.xlu0 %281
        %283 = vset.pattern.permute.xlu0 0
        %284 = vperm.xlu0 %283, %v233
        %v285 = vpop.permute.xlu0 %284
        %286 = vset.pattern.permute.xlu0 0
        %287 = vperm.xlu0 %286, %v234
        %v288 = vpop.permute.xlu0 %287
        %289 = vset.pattern.permute.xlu0 0
        %290 = vperm.xlu0 %289, %v235
        %v291 = vpop.permute.xlu0 %290
        %292 = vset.pattern.permute.xlu0 0
        %293 = vperm.xlu0 %292, %v236
        %v294 = vpop.permute.xlu0 %293
        %295 = vset.pattern.permute.xlu0 0
        %296 = vperm.xlu0 %295, %v237
        %v297 = vpop.permute.xlu0 %296
        %298 = vset.pattern.permute.xlu0 0
        %299 = vperm.xlu0 %298, %v238
        %v300 = vpop.permute.xlu0 %299
        %301 = vset.pattern.permute.xlu0 0
        %302 = vperm.xlu0 %301, %v239
        %v303 = vpop.permute.xlu0 %302
        %304 = vset.pattern.permute.xlu0 0
        %305 = vperm.xlu0 %304, %v240
        %v306 = vpop.permute.xlu0 %305
        %vm307 = vcmp.eq.s32.totalorder %v261, %v258
        %vm308 = vcmp.eq.s32.totalorder %v264, %v258
        %vm309 = vcmp.eq.s32.totalorder %v267, %v258
        %vm310 = vcmp.eq.s32.totalorder %v270, %v258
        %vm311 = vcmp.eq.s32.totalorder %v273, %v258
        %vm312 = vcmp.eq.s32.totalorder %v276, %v258
        %vm313 = vcmp.eq.s32.totalorder %v279, %v258
        %vm314 = vcmp.eq.s32.totalorder %v282, %v258
        %vm315 = vcmp.eq.s32.totalorder %v285, %v258
        %vm316 = vcmp.eq.s32.totalorder %v288, %v258
        %vm317 = vcmp.eq.s32.totalorder %v291, %v258
        %vm318 = vcmp.eq.s32.totalorder %v294, %v258
        %vm319 = vcmp.eq.s32.totalorder %v297, %v258
        %vm320 = vcmp.eq.s32.totalorder %v300, %v258
        %vm321 = vcmp.eq.s32.totalorder %v303, %v258
        %vm322 = vcmp.eq.s32.totalorder %v306, %v258
        %v323 = vsel %vm307, 1.0, 0.0
        %v324 = vsel %vm308, 1.0, 0.0
        %v325 = vsel %vm309, 1.0, 0.0
        %v326 = vsel %vm310, 1.0, 0.0
        %v327 = vsel %vm311, 1.0, 0.0
        %v328 = vsel %vm312, 1.0, 0.0
        %v329 = vsel %vm313, 1.0, 0.0
        %v330 = vsel %vm314, 1.0, 0.0
        %v331 = vsel %vm315, 1.0, 0.0
        %v332 = vsel %vm316, 1.0, 0.0
        %v333 = vsel %vm317, 1.0, 0.0
        %v334 = vsel %vm318, 1.0, 0.0
        %v335 = vsel %vm319, 1.0, 0.0
        %v336 = vsel %vm320, 1.0, 0.0
        %v337 = vsel %vm321, 1.0, 0.0
        %v338 = vsel %vm322, 1.0, 0.0
        %v339 = vpack.c.bf16 %v324, %v323
        %v340 = vpack.c.bf16 %v326, %v325
        %v341 = vpack.c.bf16 %v328, %v327
        %v342 = vpack.c.bf16 %v330, %v329
        %v343 = vpack.c.bf16 %v332, %v331
        %v344 = vpack.c.bf16 %v334, %v333
        %v345 = vpack.c.bf16 %v336, %v335
        %v346 = vpack.c.bf16 %v338, %v337
        %v349 = vunpack.c.l.b16 %v243
        %v350 = vunpack.c.l.b16 %v244
        %v351 = vpack.c.b16 %v350, %v349
        %353 = vmatprep.subr.bf16.mxu0 0
        %354 = vmatpush1.bf16.msra.mxu0 %v339
        %355 = vmatprep.subr.bf16.mxu0 0
        %356 = vmatpush1.bf16.msra.mxu0 %v340
        %357 = vmatprep.subr.bf16.mxu0 0
        %358 = vmatpush1.bf16.msra.mxu0 %v341
        %359 = vmatprep.subr.bf16.mxu0 0
        %360 = vmatpush1.bf16.msra.mxu0 %v342
        %361 = vmatprep.subr.bf16.mxu0 0
        %362 = vmatpush1.bf16.msra.mxu0 %v343
        %363 = vmatprep.subr.bf16.mxu0 0
        %364 = vmatpush1.bf16.msra.mxu0 %v344
        %365 = vmatprep.subr.bf16.mxu0 0
        %366 = vmatpush1.bf16.msra.mxu0 %v345
        %367 = vmatprep.subr.bf16.mxu0 0
        %368 = vmatpush1.bf16.msra.mxu0 %v346
        %369 = vmatprep.subr.bf16.mxu0 0
        %370 = vmatpush1.bf16.msra.mxu0 0
        %371 = vmatprep.subr.bf16.mxu0 0
        %372 = vmatpush1.bf16.msra.mxu0 0
        %373 = vmatprep.subr.bf16.mxu0 0
        %374 = vmatpush1.bf16.msra.mxu0 0
        %375 = vmatprep.subr.bf16.mxu0 0
        %376 = vmatpush1.bf16.msra.mxu0 0
        %377 = vmatprep.subr.bf16.mxu0 0
        %378 = vmatpush1.bf16.msra.mxu0 0
        %379 = vmatprep.subr.bf16.mxu0 0
        %380 = vmatpush1.bf16.msra.mxu0 0
        %381 = vmatprep.subr.bf16.mxu0 0
        %382 = vmatpush1.bf16.msra.mxu0 0
        %383 = vmatprep.subr.bf16.mxu0 0
        %384 = vmatpush1.bf16.msra.mxu0 0
        %385 = vmatprep.mubr.bf16.mxu0 0
        %386 = vmatmul.mubr.bf16.gmra.mrb[0].mxu0 %v351
        %v387 = vpop.f32.mrb[0].mxu0
        %v388 = vadd.f32 0.0, %v387
        %v389 = vpop.f32.mrb[0].mxu0
        %v390 = vpop.f32.mrb[0].mxu0
        %v391 = vadd.f32 0.0, %v390
        %v392 = vpop.f32.mrb[0].mxu0
        %393 = vdwg.mxu0
        %v396 = vunpack.c.l.b16 %v241
        %v397 = vunpack.c.l.b16 %v242
        %v398 = vpack.c.b16 %v397, %v396
        %400 = vmatprep.subr.bf16.mxu0 0
        %401 = vmatpush1.bf16.msra.mxu0 %v339
        %402 = vmatprep.subr.bf16.mxu0 0
        %403 = vmatpush1.bf16.msra.mxu0 %v340
        %404 = vmatprep.subr.bf16.mxu0 0
        %405 = vmatpush1.bf16.msra.mxu0 %v341
        %406 = vmatprep.subr.bf16.mxu0 0
        %407 = vmatpush1.bf16.msra.mxu0 %v342
        %408 = vmatprep.subr.bf16.mxu0 0
        %409 = vmatpush1.bf16.msra.mxu0 %v343
        %410 = vmatprep.subr.bf16.mxu0 0
        %411 = vmatpush1.bf16.msra.mxu0 %v344
        %412 = vmatprep.subr.bf16.mxu0 0
        %413 = vmatpush1.bf16.msra.mxu0 %v345
        %414 = vmatprep.subr.bf16.mxu0 0
        %415 = vmatpush1.bf16.msra.mxu0 %v346
        %416 = vmatprep.subr.bf16.mxu0 0
        %417 = vmatpush1.bf16.msra.mxu0 0
        %418 = vmatprep.subr.bf16.mxu0 0
        %419 = vmatpush1.bf16.msra.mxu0 0
        %420 = vmatprep.subr.bf16.mxu0 0
        %421 = vmatpush1.bf16.msra.mxu0 0
        %422 = vmatprep.subr.bf16.mxu0 0
        %423 = vmatpush1.bf16.msra.mxu0 0
        %424 = vmatprep.subr.bf16.mxu0 0
        %425 = vmatpush1.bf16.msra.mxu0 0
        %426 = vmatprep.subr.bf16.mxu0 0
        %427 = vmatpush1.bf16.msra.mxu0 0
        %428 = vmatprep.subr.bf16.mxu0 0
        %429 = vmatpush1.bf16.msra.mxu0 0
        %430 = vmatprep.subr.bf16.mxu0 0
        %431 = vmatpush1.bf16.msra.mxu0 0
        %432 = vmatprep.mubr.bf16.mxu0 0
        %433 = vmatmul.mubr.bf16.gmra.mrb[0].mxu0 %v398
        %v434 = vpop.f32.mrb[0].mxu0
        %v435 = vadd.f32 %v388, %v434
        %v436 = vpop.f32.mrb[0].mxu0
        %v437 = vpop.f32.mrb[0].mxu0
        %v438 = vadd.f32 %v391, %v437
        %v439 = vpop.f32.mrb[0].mxu0
        %440 = vdwg.mxu0
        %v441 = vsub.f32 %v438, 1.0
        %v442 = vsel %vm256, 1, 0
        %v443 = vsel %vm257, 1, 0
        %vm444 = vcmp.eq.s32.totalorder %v442, 1
        %vm445 = vcmp.eq.s32.totalorder %v443, 1
        %v446 = vlaneseq
        %v447 = vshrl.u32 %v446, 7
        %v448 = vsub.s32 3, %v447
        %v449 = vrot.slane %v441, %v448
        %v450 = vsel %vm444, %v449, 0.0
        %v451 = vsel %vm445, %v449, 0.0
        %v452 = vadd.f32 %v435, %v450
        %v453 = vadd.f32 %v438, %v451
        %454 = vst [vmem:[%s207] sm:$0xff] %v452
        %455 = vst [vmem:[%s207 + $0x8] sm:$0xff] %v453
        %v456 = vadd.s32 %v258, 1
        %vm457 = vcmp.eq.s32.totalorder %v261, %v456
        %vm458 = vcmp.eq.s32.totalorder %v264, %v456
        %vm459 = vcmp.eq.s32.totalorder %v267, %v456
        %vm460 = vcmp.eq.s32.totalorder %v270, %v456
        %vm461 = vcmp.eq.s32.totalorder %v273, %v456
        %vm462 = vcmp.eq.s32.totalorder %v276, %v456
        %vm463 = vcmp.eq.s32.totalorder %v279, %v456
        %vm464 = vcmp.eq.s32.totalorder %v282, %v456
        %vm465 = vcmp.eq.s32.totalorder %v285, %v456
        %vm466 = vcmp.eq.s32.totalorder %v288, %v456
        %vm467 = vcmp.eq.s32.totalorder %v291, %v456
        %vm468 = vcmp.eq.s32.totalorder %v294, %v456
        %vm469 = vcmp.eq.s32.totalorder %v297, %v456
        %vm470 = vcmp.eq.s32.totalorder %v300, %v456
        %vm471 = vcmp.eq.s32.totalorder %v303, %v456
        %vm472 = vcmp.eq.s32.totalorder %v306, %v456
        %v473 = vsel %vm457, 1.0, 0.0
        %v474 = vsel %vm458, 1.0, 0.0
        %v475 = vsel %vm459, 1.0, 0.0
        %v476 = vsel %vm460, 1.0, 0.0
        %v477 = vsel %vm461, 1.0, 0.0
        %v478 = vsel %vm462, 1.0, 0.0
        %v479 = vsel %vm463, 1.0, 0.0
        %v480 = vsel %vm464, 1.0, 0.0
        %v481 = vsel %vm465, 1.0, 0.0
        %v482 = vsel %vm466, 1.0, 0.0
        %v483 = vsel %vm467, 1.0, 0.0
        %v484 = vsel %vm468, 1.0, 0.0
        %v485 = vsel %vm469, 1.0, 0.0
        %v486 = vsel %vm470, 1.0, 0.0
        %v487 = vsel %vm471, 1.0, 0.0
        %v488 = vsel %vm472, 1.0, 0.0
        %v489 = vpack.c.bf16 %v474, %v473
        %v490 = vpack.c.bf16 %v476, %v475
        %v491 = vpack.c.bf16 %v478, %v477
        %v492 = vpack.c.bf16 %v480, %v479
        %v493 = vpack.c.bf16 %v482, %v481
        %v494 = vpack.c.bf16 %v484, %v483
        %v495 = vpack.c.bf16 %v486, %v485
        %v496 = vpack.c.bf16 %v488, %v487
        %497 = vmatprep.subr.bf16.mxu0 0
        %498 = vmatpush1.bf16.msra.mxu0 %v489
        %499 = vmatprep.subr.bf16.mxu0 0
        %500 = vmatpush1.bf16.msra.mxu0 %v490
        %501 = vmatprep.subr.bf16.mxu0 0
        %502 = vmatpush1.bf16.msra.mxu0 %v491
        %503 = vmatprep.subr.bf16.mxu0 0
        %504 = vmatpush1.bf16.msra.mxu0 %v492
        %505 = vmatprep.subr.bf16.mxu0 0
        %506 = vmatpush1.bf16.msra.mxu0 %v493
        %507 = vmatprep.subr.bf16.mxu0 0
        %508 = vmatpush1.bf16.msra.mxu0 %v494
        %509 = vmatprep.subr.bf16.mxu0 0
        %510 = vmatpush1.bf16.msra.mxu0 %v495
        %511 = vmatprep.subr.bf16.mxu0 0
        %512 = vmatpush1.bf16.msra.mxu0 %v496
        %513 = vmatprep.subr.bf16.mxu0 0
        %514 = vmatpush1.bf16.msra.mxu0 0
        %515 = vmatprep.subr.bf16.mxu0 0
        %516 = vmatpush1.bf16.msra.mxu0 0
        %517 = vmatprep.subr.bf16.mxu0 0
        %518 = vmatpush1.bf16.msra.mxu0 0
        %519 = vmatprep.subr.bf16.mxu0 0
        %520 = vmatpush1.bf16.msra.mxu0 0
        %521 = vmatprep.subr.bf16.mxu0 0
        %522 = vmatpush1.bf16.msra.mxu0 0
        %523 = vmatprep.subr.bf16.mxu0 0
        %524 = vmatpush1.bf16.msra.mxu0 0
        %525 = vmatprep.subr.bf16.mxu0 0
        %526 = vmatpush1.bf16.msra.mxu0 0
        %527 = vmatprep.subr.bf16.mxu0 0
        %528 = vmatpush1.bf16.msra.mxu0 0
        %529 = vmatprep.mubr.bf16.mxu0 0
        %530 = vmatmul.mubr.bf16.gmra.mrb[0].mxu0 %v351
        %v531 = vpop.f32.mrb[0].mxu0
        %v532 = vadd.f32 0.0, %v531
        %v533 = vpop.f32.mrb[0].mxu0
        %v534 = vpop.f32.mrb[0].mxu0
        %v535 = vadd.f32 0.0, %v534
        %v536 = vpop.f32.mrb[0].mxu0
        %537 = vdwg.mxu0
        %538 = vmatprep.subr.bf16.mxu0 0
        %539 = vmatpush1.bf16.msra.mxu0 %v489
        %540 = vmatprep.subr.bf16.mxu0 0
        %541 = vmatpush1.bf16.msra.mxu0 %v490
        %542 = vmatprep.subr.bf16.mxu0 0
        %543 = vmatpush1.bf16.msra.mxu0 %v491
        %544 = vmatprep.subr.bf16.mxu0 0
        %545 = vmatpush1.bf16.msra.mxu0 %v492
        %546 = vmatprep.subr.bf16.mxu0 0
        %547 = vmatpush1.bf16.msra.mxu0 %v493
        %548 = vmatprep.subr.bf16.mxu0 0
        %549 = vmatpush1.bf16.msra.mxu0 %v494
        %550 = vmatprep.subr.bf16.mxu0 0
        %551 = vmatpush1.bf16.msra.mxu0 %v495
        %552 = vmatprep.subr.bf16.mxu0 0
        %553 = vmatpush1.bf16.msra.mxu0 %v496
        %554 = vmatprep.subr.bf16.mxu0 0
        %555 = vmatpush1.bf16.msra.mxu0 0
        %556 = vmatprep.subr.bf16.mxu0 0
        %557 = vmatpush1.bf16.msra.mxu0 0
        %558 = vmatprep.subr.bf16.mxu0 0
        %559 = vmatpush1.bf16.msra.mxu0 0
        %560 = vmatprep.subr.bf16.mxu0 0
        %561 = vmatpush1.bf16.msra.mxu0 0
        %562 = vmatprep.subr.bf16.mxu0 0
        %563 = vmatpush1.bf16.msra.mxu0 0
        %564 = vmatprep.subr.bf16.mxu0 0
        %565 = vmatpush1.bf16.msra.mxu0 0
        %566 = vmatprep.subr.bf16.mxu0 0
        %567 = vmatpush1.bf16.msra.mxu0 0
        %568 = vmatprep.subr.bf16.mxu0 0
        %569 = vmatpush1.bf16.msra.mxu0 0
        %570 = vmatprep.mubr.bf16.mxu0 0
        %571 = vmatmul.mubr.bf16.gmra.mrb[0].mxu0 %v398
        %v572 = vpop.f32.mrb[0].mxu0
        %v573 = vadd.f32 %v532, %v572
        %v574 = vpop.f32.mrb[0].mxu0
        %v575 = vpop.f32.mrb[0].mxu0
        %v576 = vadd.f32 %v535, %v575
        %v577 = vpop.f32.mrb[0].mxu0
        %578 = vdwg.mxu0
        %v579 = vsub.f32 %v576, 1.0
        %v580 = vlaneseq
        %v581 = vshrl.u32 %v580, 7
        %v582 = vsub.s32 3, %v581
        %v583 = vrot.slane %v579, %v582
        %v584 = vsel %vm444, %v583, 0.0
        %v585 = vsel %vm445, %v583, 0.0
        %v586 = vadd.f32 %v573, %v584
        %v587 = vadd.f32 %v576, %v585
        %s588 = scalar_lea.vmem %s207, 16 [#allocation2]
        %589 = vst [vmem:[%s588] sm:$0xff] %v586
        %590 = vst [vmem:[%s588 + $0x8] sm:$0xff] %v587
        %v591 = vadd.s32 %v258, 2
        %vm592 = vcmp.eq.s32.totalorder %v261, %v591
        %vm593 = vcmp.eq.s32.totalorder %v264, %v591
        %vm594 = vcmp.eq.s32.totalorder %v267, %v591
        %vm595 = vcmp.eq.s32.totalorder %v270, %v591
        %vm596 = vcmp.eq.s32.totalorder %v273, %v591
        %vm597 = vcmp.eq.s32.totalorder %v276, %v591
        %vm598 = vcmp.eq.s32.totalorder %v279, %v591
        %vm599 = vcmp.eq.s32.totalorder %v282, %v591
        %vm600 = vcmp.eq.s32.totalorder %v285, %v591
        %vm601 = vcmp.eq.s32.totalorder %v288, %v591
        %vm602 = vcmp.eq.s32.totalorder %v291, %v591
        %vm603 = vcmp.eq.s32.totalorder %v294, %v591
        %vm604 = vcmp.eq.s32.totalorder %v297, %v591
        %vm605 = vcmp.eq.s32.totalorder %v300, %v591
        %vm606 = vcmp.eq.s32.totalorder %v303, %v591
        %vm607 = vcmp.eq.s32.totalorder %v306, %v591
        %v608 = vsel %vm592, 1.0, 0.0
        %v609 = vsel %vm593, 1.0, 0.0
        %v610 = vsel %vm594, 1.0, 0.0
        %v611 = vsel %vm595, 1.0, 0.0
        %v612 = vsel %vm596, 1.0, 0.0
        %v613 = vsel %vm597, 1.0, 0.0
        %v614 = vsel %vm598, 1.0, 0.0
        %v615 = vsel %vm599, 1.0, 0.0
        %v616 = vsel %vm600, 1.0, 0.0
        %v617 = vsel %vm601, 1.0, 0.0
        %v618 = vsel %vm602, 1.0, 0.0
        %v619 = vsel %vm603, 1.0, 0.0
        %v620 = vsel %vm604, 1.0, 0.0
        %v621 = vsel %vm605, 1.0, 0.0
        %v622 = vsel %vm606, 1.0, 0.0
        %v623 = vsel %vm607, 1.0, 0.0
        %v624 = vpack.c.bf16 %v609, %v608
        %v625 = vpack.c.bf16 %v611, %v610
        %v626 = vpack.c.bf16 %v613, %v612
        %v627 = vpack.c.bf16 %v615, %v614
        %v628 = vpack.c.bf16 %v617, %v616
        %v629 = vpack.c.bf16 %v619, %v618
        %v630 = vpack.c.bf16 %v621, %v620
        %v631 = vpack.c.bf16 %v623, %v622
        %632 = vmatprep.subr.bf16.mxu0 0
        %633 = vmatpush1.bf16.msra.mxu0 %v624
        %634 = vmatprep.subr.bf16.mxu0 0
        %635 = vmatpush1.bf16.msra.mxu0 %v625
        %636 = vmatprep.subr.bf16.mxu0 0
        %637 = vmatpush1.bf16.msra.mxu0 %v626
        %638 = vmatprep.subr.bf16.mxu0 0
        %639 = vmatpush1.bf16.msra.mxu0 %v627
        %640 = vmatprep.subr.bf16.mxu0 0
        %641 = vmatpush1.bf16.msra.mxu0 %v628
        %642 = vmatprep.subr.bf16.mxu0 0
        %643 = vmatpush1.bf16.msra.mxu0 %v629
        %644 = vmatprep.subr.bf16.mxu0 0
        %645 = vmatpush1.bf16.msra.mxu0 %v630
        %646 = vmatprep.subr.bf16.mxu0 0
        %647 = vmatpush1.bf16.msra.mxu0 %v631
        %648 = vmatprep.subr.bf16.mxu0 0
        %649 = vmatpush1.bf16.msra.mxu0 0
        %650 = vmatprep.subr.bf16.mxu0 0
        %651 = vmatpush1.bf16.msra.mxu0 0
        %652 = vmatprep.subr.bf16.mxu0 0
        %653 = vmatpush1.bf16.msra.mxu0 0
        %654 = vmatprep.subr.bf16.mxu0 0
        %655 = vmatpush1.bf16.msra.mxu0 0
        %656 = vmatprep.subr.bf16.mxu0 0
        %657 = vmatpush1.bf16.msra.mxu0 0
        %658 = vmatprep.subr.bf16.mxu0 0
        %659 = vmatpush1.bf16.msra.mxu0 0
        %660 = vmatprep.subr.bf16.mxu0 0
        %661 = vmatpush1.bf16.msra.mxu0 0
        %662 = vmatprep.subr.bf16.mxu0 0
        %663 = vmatpush1.bf16.msra.mxu0 0
        %664 = vmatprep.mubr.bf16.mxu0 0
        %665 = vmatmul.mubr.bf16.gmra.mrb[0].mxu0 %v351
        %v666 = vpop.f32.mrb[0].mxu0
        %v667 = vadd.f32 0.0, %v666
        %v668 = vpop.f32.mrb[0].mxu0
        %v669 = vpop.f32.mrb[0].mxu0
        %v670 = vadd.f32 0.0, %v669
        %v671 = vpop.f32.mrb[0].mxu0
        %672 = vdwg.mxu0
        %673 = vmatprep.subr.bf16.mxu0 0
        %674 = vmatpush1.bf16.msra.mxu0 %v624
        %675 = vmatprep.subr.bf16.mxu0 0
        %676 = vmatpush1.bf16.msra.mxu0 %v625
        %677 = vmatprep.subr.bf16.mxu0 0
        %678 = vmatpush1.bf16.msra.mxu0 %v626
        %679 = vmatprep.subr.bf16.mxu0 0
        %680 = vmatpush1.bf16.msra.mxu0 %v627
        %681 = vmatprep.subr.bf16.mxu0 0
        %682 = vmatpush1.bf16.msra.mxu0 %v628
        %683 = vmatprep.subr.bf16.mxu0 0
        %684 = vmatpush1.bf16.msra.mxu0 %v629
        %685 = vmatprep.subr.bf16.mxu0 0
        %686 = vmatpush1.bf16.msra.mxu0 %v630
        %687 = vmatprep.subr.bf16.mxu0 0
        %688 = vmatpush1.bf16.msra.mxu0 %v631
        %689 = vmatprep.subr.bf16.mxu0 0
        %690 = vmatpush1.bf16.msra.mxu0 0
        %691 = vmatprep.subr.bf16.mxu0 0
        %692 = vmatpush1.bf16.msra.mxu0 0
        %693 = vmatprep.subr.bf16.mxu0 0
        %694 = vmatpush1.bf16.msra.mxu0 0
        %695 = vmatprep.subr.bf16.mxu0 0
        %696 = vmatpush1.bf16.msra.mxu0 0
        %697 = vmatprep.subr.bf16.mxu0 0
        %698 = vmatpush1.bf16.msra.mxu0 0
        %699 = vmatprep.subr.bf16.mxu0 0
        %700 = vmatpush1.bf16.msra.mxu0 0
        %701 = vmatprep.subr.bf16.mxu0 0
        %702 = vmatpush1.bf16.msra.mxu0 0
        %703 = vmatprep.subr.bf16.mxu0 0
        %704 = vmatpush1.bf16.msra.mxu0 0
        %705 = vmatprep.mubr.bf16.mxu0 0
        %706 = vmatmul.mubr.bf16.gmra.mrb[0].mxu0 %v398
        %v707 = vpop.f32.mrb[0].mxu0
        %v708 = vadd.f32 %v667, %v707
        %v709 = vpop.f32.mrb[0].mxu0
        %v710 = vpop.f32.mrb[0].mxu0
        %v711 = vadd.f32 %v670, %v710
        %v712 = vpop.f32.mrb[0].mxu0
        %713 = vdwg.mxu0
        %v714 = vsub.f32 %v711, 1.0
        %v715 = vlaneseq
        %v716 = vshrl.u32 %v715, 7
        %v717 = vsub.s32 3, %v716
        %v718 = vrot.slane %v714, %v717
        %v719 = vsel %vm444, %v718, 0.0
        %v720 = vsel %vm445, %v718, 0.0
        %v721 = vadd.f32 %v708, %v719
        %v722 = vadd.f32 %v711, %v720
        %s723 = scalar_lea.vmem %s207, 32 [#allocation2]
        %724 = vst [vmem:[%s723] sm:$0xff] %v721
        %725 = vst [vmem:[%s723 + $0x8] sm:$0xff] %v722
        %v726 = vadd.s32 %v258, 3
        %vm727 = vcmp.eq.s32.totalorder %v261, %v726
        %vm728 = vcmp.eq.s32.totalorder %v264, %v726
        %vm729 = vcmp.eq.s32.totalorder %v267, %v726
        %vm730 = vcmp.eq.s32.totalorder %v270, %v726
        %vm731 = vcmp.eq.s32.totalorder %v273, %v726
        %vm732 = vcmp.eq.s32.totalorder %v276, %v726
        %vm733 = vcmp.eq.s32.totalorder %v279, %v726
        %vm734 = vcmp.eq.s32.totalorder %v282, %v726
        %vm735 = vcmp.eq.s32.totalorder %v285, %v726
        %vm736 = vcmp.eq.s32.totalorder %v288, %v726
        %vm737 = vcmp.eq.s32.totalorder %v291, %v726
        %vm738 = vcmp.eq.s32.totalorder %v294, %v726
        %vm739 = vcmp.eq.s32.totalorder %v297, %v726
        %vm740 = vcmp.eq.s32.totalorder %v300, %v726
        %vm741 = vcmp.eq.s32.totalorder %v303, %v726
        %vm742 = vcmp.eq.s32.totalorder %v306, %v726
        %v743 = vsel %vm727, 1.0, 0.0
        %v744 = vsel %vm728, 1.0, 0.0
        %v745 = vsel %vm729, 1.0, 0.0
        %v746 = vsel %vm730, 1.0, 0.0
        %v747 = vsel %vm731, 1.0, 0.0
        %v748 = vsel %vm732, 1.0, 0.0
        %v749 = vsel %vm733, 1.0, 0.0
        %v750 = vsel %vm734, 1.0, 0.0
        %v751 = vsel %vm735, 1.0, 0.0
        %v752 = vsel %vm736, 1.0, 0.0
        %v753 = vsel %vm737, 1.0, 0.0
        %v754 = vsel %vm738, 1.0, 0.0
        %v755 = vsel %vm739, 1.0, 0.0
        %v756 = vsel %vm740, 1.0, 0.0
        %v757 = vsel %vm741, 1.0, 0.0
        %v758 = vsel %vm742, 1.0, 0.0
        %v759 = vpack.c.bf16 %v744, %v743
        %v760 = vpack.c.bf16 %v746, %v745
        %v761 = vpack.c.bf16 %v748, %v747
        %v762 = vpack.c.bf16 %v750, %v749
        %v763 = vpack.c.bf16 %v752, %v751
        %v764 = vpack.c.bf16 %v754, %v753
        %v765 = vpack.c.bf16 %v756, %v755
        %v766 = vpack.c.bf16 %v758, %v757
        %767 = vmatprep.subr.bf16.mxu0 0
        %768 = vmatpush1.bf16.msra.mxu0 %v759
        %769 = vmatprep.subr.bf16.mxu0 0
        %770 = vmatpush1.bf16.msra.mxu0 %v760
        %771 = vmatprep.subr.bf16.mxu0 0
        %772 = vmatpush1.bf16.msra.mxu0 %v761
        %773 = vmatprep.subr.bf16.mxu0 0
        %774 = vmatpush1.bf16.msra.mxu0 %v762
        %775 = vmatprep.subr.bf16.mxu0 0
        %776 = vmatpush1.bf16.msra.mxu0 %v763
        %777 = vmatprep.subr.bf16.mxu0 0
        %778 = vmatpush1.bf16.msra.mxu0 %v764
        %779 = vmatprep.subr.bf16.mxu0 0
        %780 = vmatpush1.bf16.msra.mxu0 %v765
        %781 = vmatprep.subr.bf16.mxu0 0
        %782 = vmatpush1.bf16.msra.mxu0 %v766
        %783 = vmatprep.subr.bf16.mxu0 0
        %784 = vmatpush1.bf16.msra.mxu0 0
        %785 = vmatprep.subr.bf16.mxu0 0
        %786 = vmatpush1.bf16.msra.mxu0 0
        %787 = vmatprep.subr.bf16.mxu0 0
        %788 = vmatpush1.bf16.msra.mxu0 0
        %789 = vmatprep.subr.bf16.mxu0 0
        %790 = vmatpush1.bf16.msra.mxu0 0
        %791 = vmatprep.subr.bf16.mxu0 0
        %792 = vmatpush1.bf16.msra.mxu0 0
        %793 = vmatprep.subr.bf16.mxu0 0
        %794 = vmatpush1.bf16.msra.mxu0 0
        %795 = vmatprep.subr.bf16.mxu0 0
        %796 = vmatpush1.bf16.msra.mxu0 0
        %797 = vmatprep.subr.bf16.mxu0 0
        %798 = vmatpush1.bf16.msra.mxu0 0
        %799 = vmatprep.mubr.bf16.mxu0 0
        %800 = vmatmul.mubr.bf16.gmra.mrb[0].mxu0 %v351
        %v801 = vpop.f32.mrb[0].mxu0
        %v802 = vadd.f32 0.0, %v801
        %v803 = vpop.f32.mrb[0].mxu0
        %v804 = vpop.f32.mrb[0].mxu0
        %v805 = vadd.f32 0.0, %v804
        %v806 = vpop.f32.mrb[0].mxu0
        %807 = vdwg.mxu0
        %808 = vmatprep.subr.bf16.mxu0 0
        %809 = vmatpush1.bf16.msra.mxu0 %v759
        %810 = vmatprep.subr.bf16.mxu0 0
        %811 = vmatpush1.bf16.msra.mxu0 %v760
        %812 = vmatprep.subr.bf16.mxu0 0
        %813 = vmatpush1.bf16.msra.mxu0 %v761
        %814 = vmatprep.subr.bf16.mxu0 0
        %815 = vmatpush1.bf16.msra.mxu0 %v762
        %816 = vmatprep.subr.bf16.mxu0 0
        %817 = vmatpush1.bf16.msra.mxu0 %v763
        %818 = vmatprep.subr.bf16.mxu0 0
        %819 = vmatpush1.bf16.msra.mxu0 %v764
        %820 = vmatprep.subr.bf16.mxu0 0
        %821 = vmatpush1.bf16.msra.mxu0 %v765
        %822 = vmatprep.subr.bf16.mxu0 0
        %823 = vmatpush1.bf16.msra.mxu0 %v766
        %824 = vmatprep.subr.bf16.mxu0 0
        %825 = vmatpush1.bf16.msra.mxu0 0
        %826 = vmatprep.subr.bf16.mxu0 0
        %827 = vmatpush1.bf16.msra.mxu0 0
        %828 = vmatprep.subr.bf16.mxu0 0
        %829 = vmatpush1.bf16.msra.mxu0 0
        %830 = vmatprep.subr.bf16.mxu0 0
        %831 = vmatpush1.bf16.msra.mxu0 0
        %832 = vmatprep.subr.bf16.mxu0 0
        %833 = vmatpush1.bf16.msra.mxu0 0
        %834 = vmatprep.subr.bf16.mxu0 0
        %835 = vmatpush1.bf16.msra.mxu0 0
        %836 = vmatprep.subr.bf16.mxu0 0
        %837 = vmatpush1.bf16.msra.mxu0 0
        %838 = vmatprep.subr.bf16.mxu0 0
        %839 = vmatpush1.bf16.msra.mxu0 0
        %840 = vmatprep.mubr.bf16.mxu0 0
        %841 = vmatmul.mubr.bf16.gmra.mrb[0].mxu0 %v398
        %v842 = vpop.f32.mrb[0].mxu0
        %v843 = vadd.f32 %v802, %v842
        %v844 = vpop.f32.mrb[0].mxu0
        %v845 = vpop.f32.mrb[0].mxu0
        %v846 = vadd.f32 %v805, %v845
        %v847 = vpop.f32.mrb[0].mxu0
        %848 = vdwg.mxu0
        %v849 = vsub.f32 %v846, 1.0
        %v850 = vlaneseq
        %v851 = vshrl.u32 %v850, 7
        %v852 = vsub.s32 3, %v851
        %v853 = vrot.slane %v849, %v852
        %v854 = vsel %vm444, %v853, 0.0
        %v855 = vsel %vm445, %v853, 0.0
        %v856 = vadd.f32 %v843, %v854
        %v857 = vadd.f32 %v846, %v855
        %s858 = scalar_lea.vmem %s207, 48 [#allocation2]
        %859 = vst [vmem:[%s858] sm:$0xff] %v856
        %860 = vst [vmem:[%s858 + $0x8] sm:$0xff] %v857
        %v861 = vadd.s32 %v258, 4
        %vm862 = vcmp.eq.s32.totalorder %v261, %v861
        %vm863 = vcmp.eq.s32.totalorder %v264, %v861
        %vm864 = vcmp.eq.s32.totalorder %v267, %v861
        %vm865 = vcmp.eq.s32.totalorder %v270, %v861
        %vm866 = vcmp.eq.s32.totalorder %v273, %v861
        %vm867 = vcmp.eq.s32.totalorder %v276, %v861
        %vm868 = vcmp.eq.s32.totalorder %v279, %v861
        %vm869 = vcmp.eq.s32.totalorder %v282, %v861
        %vm870 = vcmp.eq.s32.totalorder %v285, %v861
        %vm871 = vcmp.eq.s32.totalorder %v288, %v861
        %vm872 = vcmp.eq.s32.totalorder %v291, %v861
        %vm873 = vcmp.eq.s32.totalorder %v294, %v861
        %vm874 = vcmp.eq.s32.totalorder %v297, %v861
        %vm875 = vcmp.eq.s32.totalorder %v300, %v861
        %vm876 = vcmp.eq.s32.totalorder %v303, %v861
        %vm877 = vcmp.eq.s32.totalorder %v306, %v861
        %v878 = vsel %vm862, 1.0, 0.0
        %v879 = vsel %vm863, 1.0, 0.0
        %v880 = vsel %vm864, 1.0, 0.0
        %v881 = vsel %vm865, 1.0, 0.0
        %v882 = vsel %vm866, 1.0, 0.0
        %v883 = vsel %vm867, 1.0, 0.0
        %v884 = vsel %vm868, 1.0, 0.0
        %v885 = vsel %vm869, 1.0, 0.0
        %v886 = vsel %vm870, 1.0, 0.0
        %v887 = vsel %vm871, 1.0, 0.0
        %v888 = vsel %vm872, 1.0, 0.0
        %v889 = vsel %vm873, 1.0, 0.0
        %v890 = vsel %vm874, 1.0, 0.0
        %v891 = vsel %vm875, 1.0, 0.0
        %v892 = vsel %vm876, 1.0, 0.0
        %v893 = vsel %vm877, 1.0, 0.0
        %v894 = vpack.c.bf16 %v879, %v878
        %v895 = vpack.c.bf16 %v881, %v880
        %v896 = vpack.c.bf16 %v883, %v882
        %v897 = vpack.c.bf16 %v885, %v884
        %v898 = vpack.c.bf16 %v887, %v886
        %v899 = vpack.c.bf16 %v889, %v888
        %v900 = vpack.c.bf16 %v891, %v890
        %v901 = vpack.c.bf16 %v893, %v892
        %902 = vmatprep.subr.bf16.mxu0 0
        %903 = vmatpush1.bf16.msra.mxu0 %v894
        %904 = vmatprep.subr.bf16.mxu0 0
        %905 = vmatpush1.bf16.msra.mxu0 %v895
        %906 = vmatprep.subr.bf16.mxu0 0
        %907 = vmatpush1.bf16.msra.mxu0 %v896
        %908 = vmatprep.subr.bf16.mxu0 0
        %909 = vmatpush1.bf16.msra.mxu0 %v897
        %910 = vmatprep.subr.bf16.mxu0 0
        %911 = vmatpush1.bf16.msra.mxu0 %v898
        %912 = vmatprep.subr.bf16.mxu0 0
        %913 = vmatpush1.bf16.msra.mxu0 %v899
        %914 = vmatprep.subr.bf16.mxu0 0
        %915 = vmatpush1.bf16.msra.mxu0 %v900
        %916 = vmatprep.subr.bf16.mxu0 0
        %917 = vmatpush1.bf16.msra.mxu0 %v901
        %918 = vmatprep.subr.bf16.mxu0 0
        %919 = vmatpush1.bf16.msra.mxu0 0
        %920 = vmatprep.subr.bf16.mxu0 0
        %921 = vmatpush1.bf16.msra.mxu0 0
        %922 = vmatprep.subr.bf16.mxu0 0
        %923 = vmatpush1.bf16.msra.mxu0 0
        %924 = vmatprep.subr.bf16.mxu0 0
        %925 = vmatpush1.bf16.msra.mxu0 0
        %926 = vmatprep.subr.bf16.mxu0 0
        %927 = vmatpush1.bf16.msra.mxu0 0
        %928 = vmatprep.subr.bf16.mxu0 0
        %929 = vmatpush1.bf16.msra.mxu0 0
        %930 = vmatprep.subr.bf16.mxu0 0
        %931 = vmatpush1.bf16.msra.mxu0 0
        %932 = vmatprep.subr.bf16.mxu0 0
        %933 = vmatpush1.bf16.msra.mxu0 0
        %934 = vmatprep.mubr.bf16.mxu0 0
        %935 = vmatmul.mubr.bf16.gmra.mrb[0].mxu0 %v351
        %v936 = vpop.f32.mrb[0].mxu0
        %v937 = vadd.f32 0.0, %v936
        %v938 = vpop.f32.mrb[0].mxu0
        %v939 = vpop.f32.mrb[0].mxu0
        %v940 = vadd.f32 0.0, %v939
        %v941 = vpop.f32.mrb[0].mxu0
        %942 = vdwg.mxu0
        %943 = vmatprep.subr.bf16.mxu0 0
        %944 = vmatpush1.bf16.msra.mxu0 %v894
        %945 = vmatprep.subr.bf16.mxu0 0
        %946 = vmatpush1.bf16.msra.mxu0 %v895
        %947 = vmatprep.subr.bf16.mxu0 0
        %948 = vmatpush1.bf16.msra.mxu0 %v896
        %949 = vmatprep.subr.bf16.mxu0 0
        %950 = vmatpush1.bf16.msra.mxu0 %v897
        %951 = vmatprep.subr.bf16.mxu0 0
        %952 = vmatpush1.bf16.msra.mxu0 %v898
        %953 = vmatprep.subr.bf16.mxu0 0
        %954 = vmatpush1.bf16.msra.mxu0 %v899
        %955 = vmatprep.subr.bf16.mxu0 0
        %956 = vmatpush1.bf16.msra.mxu0 %v900
        %957 = vmatprep.subr.bf16.mxu0 0
        %958 = vmatpush1.bf16.msra.mxu0 %v901
        %959 = vmatprep.subr.bf16.mxu0 0
        %960 = vmatpush1.bf16.msra.mxu0 0
        %961 = vmatprep.subr.bf16.mxu0 0
        %962 = vmatpush1.bf16.msra.mxu0 0
        %963 = vmatprep.subr.bf16.mxu0 0
        %964 = vmatpush1.bf16.msra.mxu0 0
        %965 = vmatprep.subr.bf16.mxu0 0
        %966 = vmatpush1.bf16.msra.mxu0 0
        %967 = vmatprep.subr.bf16.mxu0 0
        %968 = vmatpush1.bf16.msra.mxu0 0
        %969 = vmatprep.subr.bf16.mxu0 0
        %970 = vmatpush1.bf16.msra.mxu0 0
        %971 = vmatprep.subr.bf16.mxu0 0
        %972 = vmatpush1.bf16.msra.mxu0 0
        %973 = vmatprep.subr.bf16.mxu0 0
        %974 = vmatpush1.bf16.msra.mxu0 0
        %975 = vmatprep.mubr.bf16.mxu0 0
        %976 = vmatmul.mubr.bf16.gmra.mrb[0].mxu0 %v398
        %v977 = vpop.f32.mrb[0].mxu0
        %v978 = vadd.f32 %v937, %v977
        %v979 = vpop.f32.mrb[0].mxu0
        %v980 = vpop.f32.mrb[0].mxu0
        %v981 = vadd.f32 %v940, %v980
        %v982 = vpop.f32.mrb[0].mxu0
        %983 = vdwg.mxu0
        %v984 = vsub.f32 %v981, 1.0
        %v985 = vlaneseq
        %v986 = vshrl.u32 %v985, 7
        %v987 = vsub.s32 3, %v986
        %v988 = vrot.slane %v984, %v987
        %v989 = vsel %vm444, %v988, 0.0
        %v990 = vsel %vm445, %v988, 0.0
        %v991 = vadd.f32 %v978, %v989
        %v992 = vadd.f32 %v981, %v990
        %s993 = scalar_lea.vmem %s207, 64 [#allocation2]
        %994 = vst [vmem:[%s993] sm:$0xff] %v991
        %995 = vst [vmem:[%s993 + $0x8] sm:$0xff] %v992
        %v996 = vadd.s32 %v258, 5
        %vm997 = vcmp.eq.s32.totalorder %v261, %v996
        %vm998 = vcmp.eq.s32.totalorder %v264, %v996
        %vm999 = vcmp.eq.s32.totalorder %v267, %v996
        %vm1000 = vcmp.eq.s32.totalorder %v270, %v996
        %vm1001 = vcmp.eq.s32.totalorder %v273, %v996
        %vm1002 = vcmp.eq.s32.totalorder %v276, %v996
        %vm1003 = vcmp.eq.s32.totalorder %v279, %v996
        %vm1004 = vcmp.eq.s32.totalorder %v282, %v996
        %vm1005 = vcmp.eq.s32.totalorder %v285, %v996
        %vm1006 = vcmp.eq.s32.totalorder %v288, %v996
        %vm1007 = vcmp.eq.s32.totalorder %v291, %v996
        %vm1008 = vcmp.eq.s32.totalorder %v294, %v996
        %vm1009 = vcmp.eq.s32.totalorder %v297, %v996
        %vm1010 = vcmp.eq.s32.totalorder %v300, %v996
        %vm1011 = vcmp.eq.s32.totalorder %v303, %v996
        %vm1012 = vcmp.eq.s32.totalorder %v306, %v996
        %v1013 = vsel %vm997, 1.0, 0.0
        %v1014 = vsel %vm998, 1.0, 0.0
        %v1015 = vsel %vm999, 1.0, 0.0
        %v1016 = vsel %vm1000, 1.0, 0.0
        %v1017 = vsel %vm1001, 1.0, 0.0
        %v1018 = vsel %vm1002, 1.0, 0.0
        %v1019 = vsel %vm1003, 1.0, 0.0
        %v1020 = vsel %vm1004, 1.0, 0.0
        %v1021 = vsel %vm1005, 1.0, 0.0
        %v1022 = vsel %vm1006, 1.0, 0.0
        %v1023 = vsel %vm1007, 1.0, 0.0
        %v1024 = vsel %vm1008, 1.0, 0.0
        %v1025 = vsel %vm1009, 1.0, 0.0
        %v1026 = vsel %vm1010, 1.0, 0.0
        %v1027 = vsel %vm1011, 1.0, 0.0
        %v1028 = vsel %vm1012, 1.0, 0.0
        %v1029 = vpack.c.bf16 %v1014, %v1013
        %v1030 = vpack.c.bf16 %v1016, %v1015
        %v1031 = vpack.c.bf16 %v1018, %v1017
        %v1032 = vpack.c.bf16 %v1020, %v1019
        %v1033 = vpack.c.bf16 %v1022, %v1021
        %v1034 = vpack.c.bf16 %v1024, %v1023
        %v1035 = vpack.c.bf16 %v1026, %v1025
        %v1036 = vpack.c.bf16 %v1028, %v1027
        %1037 = vmatprep.subr.bf16.mxu0 0
        %1038 = vmatpush1.bf16.msra.mxu0 %v1029
        %1039 = vmatprep.subr.bf16.mxu0 0
        %1040 = vmatpush1.bf16.msra.mxu0 %v1030
        %1041 = vmatprep.subr.bf16.mxu0 0
        %1042 = vmatpush1.bf16.msra.mxu0 %v1031
        %1043 = vmatprep.subr.bf16.mxu0 0
        %1044 = vmatpush1.bf16.msra.mxu0 %v1032
        %1045 = vmatprep.subr.bf16.mxu0 0
        %1046 = vmatpush1.bf16.msra.mxu0 %v1033
        %1047 = vmatprep.subr.bf16.mxu0 0
        %1048 = vmatpush1.bf16.msra.mxu0 %v1034
        %1049 = vmatprep.subr.bf16.mxu0 0
        %1050 = vmatpush1.bf16.msra.mxu0 %v1035
        %1051 = vmatprep.subr.bf16.mxu0 0
        %1052 = vmatpush1.bf16.msra.mxu0 %v1036
        %1053 = vmatprep.subr.bf16.mxu0 0
        %1054 = vmatpush1.bf16.msra.mxu0 0
        %1055 = vmatprep.subr.bf16.mxu0 0
        %1056 = vmatpush1.bf16.msra.mxu0 0
        %1057 = vmatprep.subr.bf16.mxu0 0
        %1058 = vmatpush1.bf16.msra.mxu0 0
        %1059 = vmatprep.subr.bf16.mxu0 0
        %1060 = vmatpush1.bf16.msra.mxu0 0
        %1061 = vmatprep.subr.bf16.mxu0 0
        %1062 = vmatpush1.bf16.msra.mxu0 0
        %1063 = vmatprep.subr.bf16.mxu0 0
        %1064 = vmatpush1.bf16.msra.mxu0 0
        %1065 = vmatprep.subr.bf16.mxu0 0
        %1066 = vmatpush1.bf16.msra.mxu0 0
        %1067 = vmatprep.subr.bf16.mxu0 0
        %1068 = vmatpush1.bf16.msra.mxu0 0
        %1069 = vmatprep.mubr.bf16.mxu0 0
        %1070 = vmatmul.mubr.bf16.gmra.mrb[0].mxu0 %v351
        %v1071 = vpop.f32.mrb[0].mxu0
        %v1072 = vadd.f32 0.0, %v1071
        %v1073 = vpop.f32.mrb[0].mxu0
        %v1074 = vpop.f32.mrb[0].mxu0
        %v1075 = vadd.f32 0.0, %v1074
        %v1076 = vpop.f32.mrb[0].mxu0
        %1077 = vdwg.mxu0
        %1078 = vmatprep.subr.bf16.mxu0 0
        %1079 = vmatpush1.bf16.msra.mxu0 %v1029
        %1080 = vmatprep.subr.bf16.mxu0 0
        %1081 = vmatpush1.bf16.msra.mxu0 %v1030
        %1082 = vmatprep.subr.bf16.mxu0 0
        %1083 = vmatpush1.bf16.msra.mxu0 %v1031
        %1084 = vmatprep.subr.bf16.mxu0 0
        %1085 = vmatpush1.bf16.msra.mxu0 %v1032
        %1086 = vmatprep.subr.bf16.mxu0 0
        %1087 = vmatpush1.bf16.msra.mxu0 %v1033
        %1088 = vmatprep.subr.bf16.mxu0 0
        %1089 = vmatpush1.bf16.msra.mxu0 %v1034
        %1090 = vmatprep.subr.bf16.mxu0 0
        %1091 = vmatpush1.bf16.msra.mxu0 %v1035
        %1092 = vmatprep.subr.bf16.mxu0 0
        %1093 = vmatpush1.bf16.msra.mxu0 %v1036
        %1094 = vmatprep.subr.bf16.mxu0 0
        %1095 = vmatpush1.bf16.msra.mxu0 0
        %1096 = vmatprep.subr.bf16.mxu0 0
        %1097 = vmatpush1.bf16.msra.mxu0 0
        %1098 = vmatprep.subr.bf16.mxu0 0
        %1099 = vmatpush1.bf16.msra.mxu0 0
        %1100 = vmatprep.subr.bf16.mxu0 0
        %1101 = vmatpush1.bf16.msra.mxu0 0
        %1102 = vmatprep.subr.bf16.mxu0 0
        %1103 = vmatpush1.bf16.msra.mxu0 0
        %1104 = vmatprep.subr.bf16.mxu0 0
        %1105 = vmatpush1.bf16.msra.mxu0 0
        %1106 = vmatprep.subr.bf16.mxu0 0
        %1107 = vmatpush1.bf16.msra.mxu0 0
        %1108 = vmatprep.subr.bf16.mxu0 0
        %1109 = vmatpush1.bf16.msra.mxu0 0
        %1110 = vmatprep.mubr.bf16.mxu0 0
        %1111 = vmatmul.mubr.bf16.gmra.mrb[0].mxu0 %v398
        %v1112 = vpop.f32.mrb[0].mxu0
        %v1113 = vadd.f32 %v1072, %v1112
        %v1114 = vpop.f32.mrb[0].mxu0
        %v1115 = vpop.f32.mrb[0].mxu0
        %v1116 = vadd.f32 %v1075, %v1115
        %v1117 = vpop.f32.mrb[0].mxu0
        %1118 = vdwg.mxu0
        %v1119 = vsub.f32 %v1116, 1.0
        %v1120 = vlaneseq
        %v1121 = vshrl.u32 %v1120, 7
        %v1122 = vsub.s32 3, %v1121
        %v1123 = vrot.slane %v1119, %v1122
        %v1124 = vsel %vm444, %v1123, 0.0
        %v1125 = vsel %vm445, %v1123, 0.0
        %v1126 = vadd.f32 %v1113, %v1124
        %v1127 = vadd.f32 %v1116, %v1125
        %s1128 = scalar_lea.vmem %s207, 80 [#allocation2]
        %1129 = vst [vmem:[%s1128] sm:$0xff] %v1126
        %1130 = vst [vmem:[%s1128 + $0x8] sm:$0xff] %v1127
        %v1131 = vadd.s32 %v258, 6
        %vm1132 = vcmp.eq.s32.totalorder %v261, %v1131
        %vm1133 = vcmp.eq.s32.totalorder %v264, %v1131
        %vm1134 = vcmp.eq.s32.totalorder %v267, %v1131
        %vm1135 = vcmp.eq.s32.totalorder %v270, %v1131
        %vm1136 = vcmp.eq.s32.totalorder %v273, %v1131
        %vm1137 = vcmp.eq.s32.totalorder %v276, %v1131
        %vm1138 = vcmp.eq.s32.totalorder %v279, %v1131
        %vm1139 = vcmp.eq.s32.totalorder %v282, %v1131
        %vm1140 = vcmp.eq.s32.totalorder %v285, %v1131
        %vm1141 = vcmp.eq.s32.totalorder %v288, %v1131
        %vm1142 = vcmp.eq.s32.totalorder %v291, %v1131
        %vm1143 = vcmp.eq.s32.totalorder %v294, %v1131
        %vm1144 = vcmp.eq.s32.totalorder %v297, %v1131
        %vm1145 = vcmp.eq.s32.totalorder %v300, %v1131
        %vm1146 = vcmp.eq.s32.totalorder %v303, %v1131
        %vm1147 = vcmp.eq.s32.totalorder %v306, %v1131
        %v1148 = vsel %vm1132, 1.0, 0.0
        %v1149 = vsel %vm1133, 1.0, 0.0
        %v1150 = vsel %vm1134, 1.0, 0.0
        %v1151 = vsel %vm1135, 1.0, 0.0
        %v1152 = vsel %vm1136, 1.0, 0.0
        %v1153 = vsel %vm1137, 1.0, 0.0
        %v1154 = vsel %vm1138, 1.0, 0.0
        %v1155 = vsel %vm1139, 1.0, 0.0
        %v1156 = vsel %vm1140, 1.0, 0.0
        %v1157 = vsel %vm1141, 1.0, 0.0
        %v1158 = vsel %vm1142, 1.0, 0.0
        %v1159 = vsel %vm1143, 1.0, 0.0
        %v1160 = vsel %vm1144, 1.0, 0.0
        %v1161 = vsel %vm1145, 1.0, 0.0
        %v1162 = vsel %vm1146, 1.0, 0.0
        %v1163 = vsel %vm1147, 1.0, 0.0
        %v1164 = vpack.c.bf16 %v1149, %v1148
        %v1165 = vpack.c.bf16 %v1151, %v1150
        %v1166 = vpack.c.bf16 %v1153, %v1152
        %v1167 = vpack.c.bf16 %v1155, %v1154
        %v1168 = vpack.c.bf16 %v1157, %v1156
        %v1169 = vpack.c.bf16 %v1159, %v1158
        %v1170 = vpack.c.bf16 %v1161, %v1160
        %v1171 = vpack.c.bf16 %v1163, %v1162
        %1172 = vmatprep.subr.bf16.mxu0 0
        %1173 = vmatpush1.bf16.msra.mxu0 %v1164
        %1174 = vmatprep.subr.bf16.mxu0 0
        %1175 = vmatpush1.bf16.msra.mxu0 %v1165
        %1176 = vmatprep.subr.bf16.mxu0 0
        %1177 = vmatpush1.bf16.msra.mxu0 %v1166
        %1178 = vmatprep.subr.bf16.mxu0 0
        %1179 = vmatpush1.bf16.msra.mxu0 %v1167
        %1180 = vmatprep.subr.bf16.mxu0 0
        %1181 = vmatpush1.bf16.msra.mxu0 %v1168
        %1182 = vmatprep.subr.bf16.mxu0 0
        %1183 = vmatpush1.bf16.msra.mxu0 %v1169
        %1184 = vmatprep.subr.bf16.mxu0 0
        %1185 = vmatpush1.bf16.msra.mxu0 %v1170
        %1186 = vmatprep.subr.bf16.mxu0 0
        %1187 = vmatpush1.bf16.msra.mxu0 %v1171
        %1188 = vmatprep.subr.bf16.mxu0 0
        %1189 = vmatpush1.bf16.msra.mxu0 0
        %1190 = vmatprep.subr.bf16.mxu0 0
        %1191 = vmatpush1.bf16.msra.mxu0 0
        %1192 = vmatprep.subr.bf16.mxu0 0
        %1193 = vmatpush1.bf16.msra.mxu0 0
        %1194 = vmatprep.subr.bf16.mxu0 0
        %1195 = vmatpush1.bf16.msra.mxu0 0
        %1196 = vmatprep.subr.bf16.mxu0 0
        %1197 = vmatpush1.bf16.msra.mxu0 0
        %1198 = vmatprep.subr.bf16.mxu0 0
        %1199 = vmatpush1.bf16.msra.mxu0 0
        %1200 = vmatprep.subr.bf16.mxu0 0
        %1201 = vmatpush1.bf16.msra.mxu0 0
        %1202 = vmatprep.subr.bf16.mxu0 0
        %1203 = vmatpush1.bf16.msra.mxu0 0
        %1204 = vmatprep.mubr.bf16.mxu0 0
        %1205 = vmatmul.mubr.bf16.gmra.mrb[0].mxu0 %v351
        %v1206 = vpop.f32.mrb[0].mxu0
        %v1207 = vadd.f32 0.0, %v1206
        %v1208 = vpop.f32.mrb[0].mxu0
        %v1209 = vpop.f32.mrb[0].mxu0
        %v1210 = vadd.f32 0.0, %v1209
        %v1211 = vpop.f32.mrb[0].mxu0
        %1212 = vdwg.mxu0
        %1213 = vmatprep.subr.bf16.mxu0 0
        %1214 = vmatpush1.bf16.msra.mxu0 %v1164
        %1215 = vmatprep.subr.bf16.mxu0 0
        %1216 = vmatpush1.bf16.msra.mxu0 %v1165
        %1217 = vmatprep.subr.bf16.mxu0 0
        %1218 = vmatpush1.bf16.msra.mxu0 %v1166
        %1219 = vmatprep.subr.bf16.mxu0 0
        %1220 = vmatpush1.bf16.msra.mxu0 %v1167
        %1221 = vmatprep.subr.bf16.mxu0 0
        %1222 = vmatpush1.bf16.msra.mxu0 %v1168
        %1223 = vmatprep.subr.bf16.mxu0 0
        %1224 = vmatpush1.bf16.msra.mxu0 %v1169
        %1225 = vmatprep.subr.bf16.mxu0 0
        %1226 = vmatpush1.bf16.msra.mxu0 %v1170
        %1227 = vmatprep.subr.bf16.mxu0 0
        %1228 = vmatpush1.bf16.msra.mxu0 %v1171
        %1229 = vmatprep.subr.bf16.mxu0 0
        %1230 = vmatpush1.bf16.msra.mxu0 0
        %1231 = vmatprep.subr.bf16.mxu0 0
        %1232 = vmatpush1.bf16.msra.mxu0 0
        %1233 = vmatprep.subr.bf16.mxu0 0
        %1234 = vmatpush1.bf16.msra.mxu0 0
        %1235 = vmatprep.subr.bf16.mxu0 0
        %1236 = vmatpush1.bf16.msra.mxu0 0
        %1237 = vmatprep.subr.bf16.mxu0 0
        %1238 = vmatpush1.bf16.msra.mxu0 0
        %1239 = vmatprep.subr.bf16.mxu0 0
        %1240 = vmatpush1.bf16.msra.mxu0 0
        %1241 = vmatprep.subr.bf16.mxu0 0
        %1242 = vmatpush1.bf16.msra.mxu0 0
        %1243 = vmatprep.subr.bf16.mxu0 0
        %1244 = vmatpush1.bf16.msra.mxu0 0
        %1245 = vmatprep.mubr.bf16.mxu0 0
        %1246 = vmatmul.mubr.bf16.gmra.mrb[0].mxu0 %v398
        %v1247 = vpop.f32.mrb[0].mxu0
        %v1248 = vadd.f32 %v1207, %v1247
        %v1249 = vpop.f32.mrb[0].mxu0
        %v1250 = vpop.f32.mrb[0].mxu0
        %v1251 = vadd.f32 %v1210, %v1250
        %v1252 = vpop.f32.mrb[0].mxu0
        %1253 = vdwg.mxu0
        %v1254 = vsub.f32 %v1251, 1.0
        %v1255 = vlaneseq
        %v1256 = vshrl.u32 %v1255, 7
        %v1257 = vsub.s32 3, %v1256
        %v1258 = vrot.slane %v1254, %v1257
        %v1259 = vsel %vm444, %v1258, 0.0
        %v1260 = vsel %vm445, %v1258, 0.0
        %v1261 = vadd.f32 %v1248, %v1259
        %v1262 = vadd.f32 %v1251, %v1260
        %s1263 = scalar_lea.vmem %s207, 96 [#allocation2]
        %1264 = vst [vmem:[%s1263] sm:$0xff] %v1261
        %1265 = vst [vmem:[%s1263 + $0x8] sm:$0xff] %v1262
        %v1266 = vadd.s32 %v258, 7
        %vm1267 = vcmp.eq.s32.totalorder %v261, %v1266
        %vm1268 = vcmp.eq.s32.totalorder %v264, %v1266
        %vm1269 = vcmp.eq.s32.totalorder %v267, %v1266
        %vm1270 = vcmp.eq.s32.totalorder %v270, %v1266
        %vm1271 = vcmp.eq.s32.totalorder %v273, %v1266
        %vm1272 = vcmp.eq.s32.totalorder %v276, %v1266
        %vm1273 = vcmp.eq.s32.totalorder %v279, %v1266
        %vm1274 = vcmp.eq.s32.totalorder %v282, %v1266
        %vm1275 = vcmp.eq.s32.totalorder %v285, %v1266
        %vm1276 = vcmp.eq.s32.totalorder %v288, %v1266
        %vm1277 = vcmp.eq.s32.totalorder %v291, %v1266
        %vm1278 = vcmp.eq.s32.totalorder %v294, %v1266
        %vm1279 = vcmp.eq.s32.totalorder %v297, %v1266
        %vm1280 = vcmp.eq.s32.totalorder %v300, %v1266
        %vm1281 = vcmp.eq.s32.totalorder %v303, %v1266
        %vm1282 = vcmp.eq.s32.totalorder %v306, %v1266
        %v1283 = vsel %vm1267, 1.0, 0.0
        %v1284 = vsel %vm1268, 1.0, 0.0
        %v1285 = vsel %vm1269, 1.0, 0.0
        %v1286 = vsel %vm1270, 1.0, 0.0
        %v1287 = vsel %vm1271, 1.0, 0.0
        %v1288 = vsel %vm1272, 1.0, 0.0
        %v1289 = vsel %vm1273, 1.0, 0.0
        %v1290 = vsel %vm1274, 1.0, 0.0
        %v1291 = vsel %vm1275, 1.0, 0.0
        %v1292 = vsel %vm1276, 1.0, 0.0
        %v1293 = vsel %vm1277, 1.0, 0.0
        %v1294 = vsel %vm1278, 1.0, 0.0
        %v1295 = vsel %vm1279, 1.0, 0.0
        %v1296 = vsel %vm1280, 1.0, 0.0
        %v1297 = vsel %vm1281, 1.0, 0.0
        %v1298 = vsel %vm1282, 1.0, 0.0
        %v1299 = vpack.c.bf16 %v1284, %v1283
        %v1300 = vpack.c.bf16 %v1286, %v1285
        %v1301 = vpack.c.bf16 %v1288, %v1287
        %v1302 = vpack.c.bf16 %v1290, %v1289
        %v1303 = vpack.c.bf16 %v1292, %v1291
        %v1304 = vpack.c.bf16 %v1294, %v1293
        %v1305 = vpack.c.bf16 %v1296, %v1295
        %v1306 = vpack.c.bf16 %v1298, %v1297
        %1307 = vmatprep.subr.bf16.mxu0 0
        %1308 = vmatpush1.bf16.msra.mxu0 %v1299
        %1309 = vmatprep.subr.bf16.mxu0 0
        %1310 = vmatpush1.bf16.msra.mxu0 %v1300
        %1311 = vmatprep.subr.bf16.mxu0 0
        %1312 = vmatpush1.bf16.msra.mxu0 %v1301
        %1313 = vmatprep.subr.bf16.mxu0 0
        %1314 = vmatpush1.bf16.msra.mxu0 %v1302
        %1315 = vmatprep.subr.bf16.mxu0 0
        %1316 = vmatpush1.bf16.msra.mxu0 %v1303
        %1317 = vmatprep.subr.bf16.mxu0 0
        %1318 = vmatpush1.bf16.msra.mxu0 %v1304
        %1319 = vmatprep.subr.bf16.mxu0 0
        %1320 = vmatpush1.bf16.msra.mxu0 %v1305
        %1321 = vmatprep.subr.bf16.mxu0 0
        %1322 = vmatpush1.bf16.msra.mxu0 %v1306
        %1323 = vmatprep.subr.bf16.mxu0 0
        %1324 = vmatpush1.bf16.msra.mxu0 0
        %1325 = vmatprep.subr.bf16.mxu0 0
        %1326 = vmatpush1.bf16.msra.mxu0 0
        %1327 = vmatprep.subr.bf16.mxu0 0
        %1328 = vmatpush1.bf16.msra.mxu0 0
        %1329 = vmatprep.subr.bf16.mxu0 0
        %1330 = vmatpush1.bf16.msra.mxu0 0
        %1331 = vmatprep.subr.bf16.mxu0 0
        %1332 = vmatpush1.bf16.msra.mxu0 0
        %1333 = vmatprep.subr.bf16.mxu0 0
        %1334 = vmatpush1.bf16.msra.mxu0 0
        %1335 = vmatprep.subr.bf16.mxu0 0
        %1336 = vmatpush1.bf16.msra.mxu0 0
        %1337 = vmatprep.subr.bf16.mxu0 0
        %1338 = vmatpush1.bf16.msra.mxu0 0
        %1339 = vmatprep.mubr.bf16.mxu0 0
        %1340 = vmatmul.mubr.bf16.gmra.mrb[0].mxu0 %v351
        %v1341 = vpop.f32.mrb[0].mxu0
        %v1342 = vadd.f32 0.0, %v1341
        %v1343 = vpop.f32.mrb[0].mxu0
        %v1344 = vpop.f32.mrb[0].mxu0
        %v1345 = vadd.f32 0.0, %v1344
        %v1346 = vpop.f32.mrb[0].mxu0
        %1347 = vdwg.mxu0
        %1348 = vmatprep.subr.bf16.mxu0 0
        %1349 = vmatpush1.bf16.msra.mxu0 %v1299
        %1350 = vmatprep.subr.bf16.mxu0 0
        %1351 = vmatpush1.bf16.msra.mxu0 %v1300
        %1352 = vmatprep.subr.bf16.mxu0 0
        %1353 = vmatpush1.bf16.msra.mxu0 %v1301
        %1354 = vmatprep.subr.bf16.mxu0 0
        %1355 = vmatpush1.bf16.msra.mxu0 %v1302
        %1356 = vmatprep.subr.bf16.mxu0 0
        %1357 = vmatpush1.bf16.msra.mxu0 %v1303
        %1358 = vmatprep.subr.bf16.mxu0 0
        %1359 = vmatpush1.bf16.msra.mxu0 %v1304
        %1360 = vmatprep.subr.bf16.mxu0 0
        %1361 = vmatpush1.bf16.msra.mxu0 %v1305
        %1362 = vmatprep.subr.bf16.mxu0 0
        %1363 = vmatpush1.bf16.msra.mxu0 %v1306
        %1364 = vmatprep.subr.bf16.mxu0 0
        %1365 = vmatpush1.bf16.msra.mxu0 0
        %1366 = vmatprep.subr.bf16.mxu0 0
        %1367 = vmatpush1.bf16.msra.mxu0 0
        %1368 = vmatprep.subr.bf16.mxu0 0
        %1369 = vmatpush1.bf16.msra.mxu0 0
        %1370 = vmatprep.subr.bf16.mxu0 0
        %1371 = vmatpush1.bf16.msra.mxu0 0
        %1372 = vmatprep.subr.bf16.mxu0 0
        %1373 = vmatpush1.bf16.msra.mxu0 0
        %1374 = vmatprep.subr.bf16.mxu0 0
        %1375 = vmatpush1.bf16.msra.mxu0 0
        %1376 = vmatprep.subr.bf16.mxu0 0
        %1377 = vmatpush1.bf16.msra.mxu0 0
        %1378 = vmatprep.subr.bf16.mxu0 0
        %1379 = vmatpush1.bf16.msra.mxu0 0
        %1380 = vmatprep.mubr.bf16.mxu0 0
        %1381 = vmatmul.mubr.bf16.gmra.mrb[0].mxu0 %v398
        %v1382 = vpop.f32.mrb[0].mxu0
        %v1383 = vadd.f32 %v1342, %v1382
        %v1384 = vpop.f32.mrb[0].mxu0
        %v1385 = vpop.f32.mrb[0].mxu0
        %v1386 = vadd.f32 %v1345, %v1385
        %v1387 = vpop.f32.mrb[0].mxu0
        %1388 = vdwg.mxu0
        %v1389 = vsub.f32 %v1386, 1.0
        %v1390 = vlaneseq
        %v1391 = vshrl.u32 %v1390, 7
        %v1392 = vsub.s32 3, %v1391
        %v1393 = vrot.slane %v1389, %v1392
        %v1394 = vsel %vm444, %v1393, 0.0
        %v1395 = vsel %vm445, %v1393, 0.0
        %v1396 = vadd.f32 %v1383, %v1394
        %v1397 = vadd.f32 %v1386, %v1395
        %s1398 = scalar_lea.vmem %s207, 112 [#allocation2]
        %1399 = vst [vmem:[%s1398] sm:$0xff] %v1396
        %1400 = vst [vmem:[%s1398 + $0x8] sm:$0xff] %v1397
        %v1401 = vadd.s32 %v258, 8
        %vm1402 = vcmp.eq.s32.totalorder %v261, %v1401
        %vm1403 = vcmp.eq.s32.totalorder %v264, %v1401
        %vm1404 = vcmp.eq.s32.totalorder %v267, %v1401
        %vm1405 = vcmp.eq.s32.totalorder %v270, %v1401
        %vm1406 = vcmp.eq.s32.totalorder %v273, %v1401
        %vm1407 = vcmp.eq.s32.totalorder %v276, %v1401
        %vm1408 = vcmp.eq.s32.totalorder %v279, %v1401
        %vm1409 = vcmp.eq.s32.totalorder %v282, %v1401
        %vm1410 = vcmp.eq.s32.totalorder %v285, %v1401
        %vm1411 = vcmp.eq.s32.totalorder %v288, %v1401
        %vm1412 = vcmp.eq.s32.totalorder %v291, %v1401
        %vm1413 = vcmp.eq.s32.totalorder %v294, %v1401
        %vm1414 = vcmp.eq.s32.totalorder %v297, %v1401
        %vm1415 = vcmp.eq.s32.totalorder %v300, %v1401
        %vm1416 = vcmp.eq.s32.totalorder %v303, %v1401
        %vm1417 = vcmp.eq.s32.totalorder %v306, %v1401
        %v1418 = vsel %vm1402, 1.0, 0.0
        %v1419 = vsel %vm1403, 1.0, 0.0
        %v1420 = vsel %vm1404, 1.0, 0.0
        %v1421 = vsel %vm1405, 1.0, 0.0
        %v1422 = vsel %vm1406, 1.0, 0.0
        %v1423 = vsel %vm1407, 1.0, 0.0
        %v1424 = vsel %vm1408, 1.0, 0.0
        %v1425 = vsel %vm1409, 1.0, 0.0
        %v1426 = vsel %vm1410, 1.0, 0.0
        %v1427 = vsel %vm1411, 1.0, 0.0
        %v1428 = vsel %vm1412, 1.0, 0.0
        %v1429 = vsel %vm1413, 1.0, 0.0
        %v1430 = vsel %vm1414, 1.0, 0.0
        %v1431 = vsel %vm1415, 1.0, 0.0
        %v1432 = vsel %vm1416, 1.0, 0.0
        %v1433 = vsel %vm1417, 1.0, 0.0
        %v1434 = vpack.c.bf16 %v1419, %v1418
        %v1435 = vpack.c.bf16 %v1421, %v1420
        %v1436 = vpack.c.bf16 %v1423, %v1422
        %v1437 = vpack.c.bf16 %v1425, %v1424
        %v1438 = vpack.c.bf16 %v1427, %v1426
        %v1439 = vpack.c.bf16 %v1429, %v1428
        %v1440 = vpack.c.bf16 %v1431, %v1430
        %v1441 = vpack.c.bf16 %v1433, %v1432
        %1442 = vmatprep.subr.bf16.mxu0 0
        %1443 = vmatpush1.bf16.msra.mxu0 %v1434
        %1444 = vmatprep.subr.bf16.mxu0 0
        %1445 = vmatpush1.bf16.msra.mxu0 %v1435
        %1446 = vmatprep.subr.bf16.mxu0 0
        %1447 = vmatpush1.bf16.msra.mxu0 %v1436
        %1448 = vmatprep.subr.bf16.mxu0 0
        %1449 = vmatpush1.bf16.msra.mxu0 %v1437
        %1450 = vmatprep.subr.bf16.mxu0 0
        %1451 = vmatpush1.bf16.msra.mxu0 %v1438
        %1452 = vmatprep.subr.bf16.mxu0 0
        %1453 = vmatpush1.bf16.msra.mxu0 %v1439
        %1454 = vmatprep.subr.bf16.mxu0 0
        %1455 = vmatpush1.bf16.msra.mxu0 %v1440
        %1456 = vmatprep.subr.bf16.mxu0 0
        %1457 = vmatpush1.bf16.msra.mxu0 %v1441
        %1458 = vmatprep.subr.bf16.mxu0 0
        %1459 = vmatpush1.bf16.msra.mxu0 0
        %1460 = vmatprep.subr.bf16.mxu0 0
        %1461 = vmatpush1.bf16.msra.mxu0 0
        %1462 = vmatprep.subr.bf16.mxu0 0
        %1463 = vmatpush1.bf16.msra.mxu0 0
        %1464 = vmatprep.subr.bf16.mxu0 0
        %1465 = vmatpush1.bf16.msra.mxu0 0
        %1466 = vmatprep.subr.bf16.mxu0 0
        %1467 = vmatpush1.bf16.msra.mxu0 0
        %1468 = vmatprep.subr.bf16.mxu0 0
        %1469 = vmatpush1.bf16.msra.mxu0 0
        %1470 = vmatprep.subr.bf16.mxu0 0
        %1471 = vmatpush1.bf16.msra.mxu0 0
        %1472 = vmatprep.subr.bf16.mxu0 0
        %1473 = vmatpush1.bf16.msra.mxu0 0
        %1474 = vmatprep.mubr.bf16.mxu0 0
        %1475 = vmatmul.mubr.bf16.gmra.mrb[0].mxu0 %v351
        %v1476 = vpop.f32.mrb[0].mxu0
        %v1477 = vadd.f32 0.0, %v1476
        %v1478 = vpop.f32.mrb[0].mxu0
        %v1479 = vpop.f32.mrb[0].mxu0
        %v1480 = vadd.f32 0.0, %v1479
        %v1481 = vpop.f32.mrb[0].mxu0
        %1482 = vdwg.mxu0
        %1483 = vmatprep.subr.bf16.mxu0 0
        %1484 = vmatpush1.bf16.msra.mxu0 %v1434
        %1485 = vmatprep.subr.bf16.mxu0 0
        %1486 = vmatpush1.bf16.msra.mxu0 %v1435
        %1487 = vmatprep.subr.bf16.mxu0 0
        %1488 = vmatpush1.bf16.msra.mxu0 %v1436
        %1489 = vmatprep.subr.bf16.mxu0 0
        %1490 = vmatpush1.bf16.msra.mxu0 %v1437
        %1491 = vmatprep.subr.bf16.mxu0 0
        %1492 = vmatpush1.bf16.msra.mxu0 %v1438
        %1493 = vmatprep.subr.bf16.mxu0 0
        %1494 = vmatpush1.bf16.msra.mxu0 %v1439
        %1495 = vmatprep.subr.bf16.mxu0 0
        %1496 = vmatpush1.bf16.msra.mxu0 %v1440
        %1497 = vmatprep.subr.bf16.mxu0 0
        %1498 = vmatpush1.bf16.msra.mxu0 %v1441
        %1499 = vmatprep.subr.bf16.mxu0 0
        %1500 = vmatpush1.bf16.msra.mxu0 0
        %1501 = vmatprep.subr.bf16.mxu0 0
        %1502 = vmatpush1.bf16.msra.mxu0 0
        %1503 = vmatprep.subr.bf16.mxu0 0
        %1504 = vmatpush1.bf16.msra.mxu0 0
        %1505 = vmatprep.subr.bf16.mxu0 0
        %1506 = vmatpush1.bf16.msra.mxu0 0
        %1507 = vmatprep.subr.bf16.mxu0 0
        %1508 = vmatpush1.bf16.msra.mxu0 0
        %1509 = vmatprep.subr.bf16.mxu0 0
        %1510 = vmatpush1.bf16.msra.mxu0 0
        %1511 = vmatprep.subr.bf16.mxu0 0
        %1512 = vmatpush1.bf16.msra.mxu0 0
        %1513 = vmatprep.subr.bf16.mxu0 0
        %1514 = vmatpush1.bf16.msra.mxu0 0
        %1515 = vmatprep.mubr.bf16.mxu0 0
        %1516 = vmatmul.mubr.bf16.gmra.mrb[0].mxu0 %v398
        %v1517 = vpop.f32.mrb[0].mxu0
        %v1518 = vadd.f32 %v1477, %v1517
        %v1519 = vpop.f32.mrb[0].mxu0
        %v1520 = vpop.f32.mrb[0].mxu0
        %v1521 = vadd.f32 %v1480, %v1520
        %v1522 = vpop.f32.mrb[0].mxu0
        %1523 = vdwg.mxu0
        %v1524 = vsub.f32 %v1521, 1.0
        %v1525 = vlaneseq
        %v1526 = vshrl.u32 %v1525, 7
        %v1527 = vsub.s32 3, %v1526
        %v1528 = vrot.slane %v1524, %v1527
        %v1529 = vsel %vm444, %v1528, 0.0
        %v1530 = vsel %vm445, %v1528, 0.0
        %v1531 = vadd.f32 %v1518, %v1529
        %v1532 = vadd.f32 %v1521, %v1530
        %s1533 = scalar_lea.vmem %s207, 128 [#allocation2]
        %1534 = vst [vmem:[%s1533] sm:$0xff] %v1531
        %1535 = vst [vmem:[%s1533 + $0x8] sm:$0xff] %v1532
        %s1536 = sand.u32 %s117, 1
        %s1537 = scalar_lea.sflag [#allocation3], %s1536
        %s1538 = sand.u32 %s117, 1
        %s1539 = smul.addr %s1538, 144
        %s1540 = scalar_lea.vmem [#allocation2], %s1539
        // Predicated region
        $region33: #{tpu_custom_call.1} parent=31 // pred_check
          %p1541 = pneg %p127
        $region34: #{tpu_custom_call.1} parent=31 // pred_check_branch
          %1543 = sbr.rel (%p1541) target = $region36
        $region35: #{tpu_custom_call.1} parent=31 // pred_region
          %s1545 = ssub.s32 2304, 2304
          %1546 = vsyncadd %s1537, %s1545
          %s1547 = smul.addr %s21, 18
          %s1548 = sadd.s32 %s22, %s1547
          %s1549 = smul.addr %s1548, 128
          %s1550 = scalar_lea.hbm %s3, %s1549
          %s1551 = sshll.u32 %s1540, 4
          %s1552 = int_to_ptr.vmem [resolvable:$true] %s1551
          %1557 = dma.vmem_to_hbm [thread:$0]  %s1552, 2304, %s1550, %s1537, 128, 128, 8
        $region36: #{tpu_custom_call.1} parent=31 // pred_fallthru
          _
      $region32: #{tpu_custom_call.1} parent=5 // pred_fallthru
        _
      %p1558 = scmp.le.s32.totalorder 2, %s12
      // Predicated region
      $region37: #{tpu_custom_call.1} parent=5 // pred_check
        %p1559 = pneg %p1558
      $region38: #{tpu_custom_call.1} parent=5 // pred_check_branch
        %1561 = sbr.rel (%p1559) target = $region40
      $region39: #{tpu_custom_call.1} parent=5 // pred_region
        %s1562 = ssub.s32 %s12, 2
        // Predicated region
        $region41: #{tpu_custom_call.1} parent=39 // pred_check
          %p1563 = pneg %p133
        $region42: #{tpu_custom_call.1} parent=39 // pred_check_branch
          %1565 = sbr.rel (%p1563) target = $region44
        $region43: #{tpu_custom_call.1} parent=39 // pred_region
          %s1566 = sand.u32 %s118, 1
          %s1567 = scalar_lea.sflag [#allocation3], %s1566
          %s1568 = sand.u32 %s118, 1
          %s1569 = smul.addr %s1568, 144
          %s1570 = scalar_lea.vmem [#allocation2], %s1569
          %1571 = dma.done %s1567, 2304
        $region44: #{tpu_custom_call.1} parent=39 // pred_fallthru
          _
      $region40: #{tpu_custom_call.1} parent=5 // pred_fallthru
        _
    $region6: #{tpu_custom_call.1} parent=1 // loop_footer
      %s16 = sadd.s32 1, %s12
    $region7: #{tpu_custom_call.1} parent=1 // loop_footer_branch
      %11 = sbr.rel target = $region3
    $region8: #{tpu_custom_call.1} parent=1 // loop_exit
      _
    %1572 = vsyncpa [#allocation3], 1
    %s1573 = scalar_lea.sflag [#allocation3], 1
    %1574 = vsyncpa %s1573, 1

</llo_original>
